<compile_context>
chip_gen: v6e
topology: v6e:2x2x1
jax: 0.10.0
libtpu: 0.0.40
codegen_flags: <defaults>
</compile_context>

<pallas_src>
import functools

import jax
import jax.numpy as jnp
from jax.experimental import pallas as pl
from jax.experimental.pallas import tpu as pltpu


# ----------------------------------------------------------------------------
# Kernels
# ----------------------------------------------------------------------------

def _ffn_residual_fused_kernel(x_ref, w1_ref, b1_ref, w2_ref, b2_ref, o_ref, *,
                               approximate):
    """Weights fully resident in VMEM: one grid axis over row tiles."""
    x = x_ref[...]                                             # (tm, H) input dtype
    xb = x.astype(jnp.bfloat16)
    h = jnp.dot(xb, w1_ref[...], preferred_element_type=jnp.float32)   # (tm, F)
    h = jax.nn.gelu(h + b1_ref[...], approximate=approximate)          # f32
    y = jnp.dot(h.astype(jnp.bfloat16), w2_ref[...],
                preferred_element_type=jnp.float32)                    # (tm, H)
    y = y + b2_ref[...] + x.astype(jnp.float32)                        # bias + residual
    o_ref[...] = y.astype(o_ref.dtype)


def _ffn_residual_reduce_kernel(x_ref, w1_ref, b1_ref, w2_ref, b2_ref, o_ref,
                                acc_ref, xb_ref, *, approximate):
    """Streaming path: grid = (row tiles [parallel], F slabs [arbitrary])."""
    f = pl.program_id(1)
    nf = pl.num_programs(1)

    @pl.when(f == 0)
    def _init():
        acc_ref[...] = jnp.zeros_like(acc_ref)
        # Hoisted bf16 cast of the x tile: done once per row tile, reused nf times.
        xb_ref[...] = x_ref[...].astype(jnp.bfloat16)

    h = jnp.dot(xb_ref[...], w1_ref[...],
                preferred_element_type=jnp.float32)            # (tm, tf) f32
    h = jax.nn.gelu(h + b1_ref[...], approximate=approximate)  # f32 VPU/EUP
    acc_ref[...] += jnp.dot(h.astype(jnp.bfloat16), w2_ref[...],
                            preferred_element_type=jnp.float32)  # (tm, H) f32

    @pl.when(f == nf - 1)
    def _finalize():
        # Bias b2 and the residual are added exactly once, in f32; the only
        # downcast is the final store.
        y = acc_ref[...] + b2_ref[...] + x_ref[...].astype(jnp.float32)
        o_ref[...] = y.astype(o_ref.dtype)


# ----------------------------------------------------------------------------
# Tile / VMEM selection helpers
# ----------------------------------------------------------------------------

def _round_up(x, m):
    return ((x + m - 1) // m) * m


def _tpu_vmem_and_cores():
    """Best-effort generation query: (VMEM capacity bytes, TensorCores per chip)."""
    vmem_cap = None
    cores = 1
    try:
        info = pltpu.get_tpu_info()
        cap = int(getattr(info, "vmem_capacity_bytes", 0) or 0)
        if cap > 0:
            vmem_cap = cap
        cores = int(getattr(info, "num_cores", 1) or 1)
    except Exception:
        pass
    kind = ""
    try:
        kind = jax.devices()[0].device_kind.lower()
    except Exception:
        pass
    is_v7 = any(t in kind for t in ("v7", "7x", "tpu7"))
    if vmem_cap is None:
        vmem_cap = (64 << 20) if is_v7 else (128 << 20)
    if is_v7:
        cores = max(cores, 2)
    return vmem_cap, cores


def _resident_bytes(tm, H, F, io):
    """VMEM working set of the weight-resident path (double-buffer worst case)."""
    return (2 * H * F * 2          # w1 bf16
            + 2 * F * H * 2        # w2 bf16
            + 2 * tm * H * io      # x tiles
            + 2 * tm * H * io      # out tiles
            + 2 * (F + H) * 4      # biases (f32)
            + tm * F * 4           # f32 GELU intermediate
            + tm * H * 4           # f32 y intermediate
            + tm * H * 2)          # bf16 x cast


def _reduce_bytes(tm, tf, H, F, io):
    """VMEM working set of the F-streaming path."""
    return (2 * H * tf * 2         # w1 slab (double-buffered)
            + 2 * tf * H * 2       # w2 slab
            + 2 * tm * H * io      # x tiles
            + 2 * tm * H * io      # out tiles
            + 2 * (tf + H) * 4     # bias slabs
            + tm * H * 4           # f32 accumulator scratch
            + tm * H * 2           # bf16 x-cast scratch
            + tm * tf * 4)         # f32 GELU slab


def _tf_candidates(F, cap=2048):
    """Descending multiples of 128 that divide F (largest first); F itself if none."""
    start = min((F // 128) * 128, cap)
    cands = [t for t in range(start, 127, -128) if F % t == 0]
    return cands or [F]


def _choose_config(M, H, F, io, vmem_cap, tm_req, tf_req, force_reduction):
    budget = int(vmem_cap * 0.70)  # headroom for Mosaic internal scratch / sems

    m16 = max(16, _round_up(M, 16))
    tm_cands = sorted(
        {c for c in (1024, 512, 256, 128, 64, 32, 16) if c <= m16} | {m16},
        reverse=True)
    if tm_req is not None:
        tm_cands = [max(16, _round_up(min(tm_req, m16), 16))]

    tf_cands = _tf_candidates(F)
    if tf_req is not None and F % tf_req == 0 and tf_req % 128 == 0:
        tf_cands = [tf_req]

    # Path 1: weights resident in VMEM (no F re-streaming, no reduction axis).
    if not force_reduction:
        for tm in tm_cands:
            if _resident_bytes(tm, H, F, io) <= budget:
                return "resident", tm, F, budget

    # Path 2: stream W1/W2 over an F-reduction axis; prefer the largest tm.
    for tm in tm_cands:
        for tf in tf_cands:
            if _reduce_bytes(tm, tf, H, F, io) <= budget:
                return "reduce", tm, tf, budget

    # Fallback: smallest tiles even if above the soft budget.
    return "reduce", tm_cands[-1], tf_cands[-1], budget


def _vmem_limit(ws_bytes, vmem_cap):
    cap = int(vmem_cap * 0.85)          # ~108 MiB on 128 MiB parts, ~54 MiB on v7x
    limit = ws_bytes + ws_bytes // 4 + (2 << 20)
    limit = max(limit, 16 << 20)
    limit = min(limit, max(cap, ws_bytes + (1 << 20)))
    return int(limit)


# ----------------------------------------------------------------------------
# Wrapper
# ----------------------------------------------------------------------------

def net_residual_add(x, w1, b1, w2, b2, *, tm=None, tf=None,
                     force_reduction=False, approximate_gelu=True):
    """y = FFN(x) + x in a single Pallas kernel.

    x : [B, S, H];  w1: [H, F], b1: [F];  w2: [F, H], b2: [H]
    tm/tf=None -> auto tile selection from the device's VMEM capacity.
    """
    B, S, H = x.shape
    F = w1.shape[1]
    M = B * S
    io = jnp.dtype(x.dtype).itemsize

    vmem_cap, num_cores = _tpu_vmem_and_cores()
    path, tm_, tf_, _ = _choose_config(M, H, F, io, vmem_cap, tm, tf,
                                       force_reduction)

    # v7x has 2 TensorCores: make sure the "parallel" row axis has >= 2 tiles.
    if num_cores >= 2 and M > 16 and -(-M // tm_) == 1:
        tm_ = max(16, _round_up(-(-M // 2), 16))

    M_pad = _round_up(M, tm_)
    nm = M_pad // tm_

    # bf16 MXU operands (halves weight DMA); accumulation stays f32.
    w1b = w1.astype(jnp.bfloat16)
    w2b = w2.astype(jnp.bfloat16)
    b1r = b1.reshape(1, F).astype(jnp.float32)
    b2r = b2.reshape(1, H).astype(jnp.float32)

    x2d = x.reshape(M, H)
    if M_pad != M:
        x2d = jnp.pad(x2d, ((0, M_pad - M), (0, 0)))

    if path == "resident":
        ws = _resident_bytes(tm_, H, F, io)
        bytes_accessed = 2 * M * H * io + 2 * H * F * 2 + (F + H) * 4
        kernel = functools.partial(_ffn_residual_fused_kernel,
                                   approximate=approximate_gelu)
        grid_spec = pltpu.PrefetchScalarGridSpec(
            num_scalar_prefetch=0,
            grid=(nm,),
            in_specs=[
                pl.BlockSpec((tm_, H), lambda i: (i, 0)),  # x rows
                pl.BlockSpec((H, F), lambda i: (0, 0)),    # w1 (resident)
                pl.BlockSpec((1, F), lambda i: (0, 0)),    # b1 (resident)
                pl.BlockSpec((F, H), lambda i: (0, 0)),    # w2 (resident)
                pl.BlockSpec((1, H), lambda i: (0, 0)),    # b2 (resident)
            ],
            out_specs=pl.BlockSpec((tm_, H), lambda i: (i, 0)),
        )
        dim_sem = ("parallel",)
    else:
        nf = F // tf_
        ws = _reduce_bytes(tm_, tf_, H, F, io)
        bytes_accessed = (2 * M * H * io
                          + nm * (2 * H * F * 2 + F * 4)   # weights re-streamed nm x
                          + H * 4)
        kernel = functools.partial(_ffn_residual_reduce_kernel,
                                   approximate=approximate_gelu)
        grid_spec = pltpu.PrefetchScalarGridSpec(
            num_scalar_prefetch=0,
            grid=(nm, nf),                                     # reduction axis last
            in_specs=[
                pl.BlockSpec((tm_, H), lambda i, f: (i, 0)),   # x rows (f-invariant)
                pl.BlockSpec((H, tf_), lambda i, f: (0, f)),   # w1 slab
                pl.BlockSpec((1, tf_), lambda i, f: (0, f)),   # b1 slab
                pl.BlockSpec((tf_, H), lambda i, f: (f, 0)),   # w2 slab
                pl.BlockSpec((1, H), lambda i, f: (0, 0)),     # b2 (invariant)
            ],
            out_specs=pl.BlockSpec((tm_, H), lambda i, f: (i, 0)),  # resident over f
            scratch_shapes=[pltpu.VMEM((tm_, H), jnp.float32),      # f32 accumulator
                            pltpu.VMEM((tm_, H), jnp.bfloat16)],    # hoisted bf16 x
        )
        dim_sem = ("parallel", "arbitrary")

    cost = pl.CostEstimate(
        flops=4 * M * H * F,                 # two MXU matmuls
        transcendentals=M * F,               # GELU
        bytes_accessed=int(bytes_accessed),
    )

    out2d = pl.pallas_call(
        kernel,
        out_shape=jax.ShapeDtypeStruct((M_pad, H), x.dtype),
        grid_spec=grid_spec,
        compiler_params=pltpu.CompilerParams(
            dimension_semantics=dim_sem,
            vmem_limit_bytes=_vmem_limit(ws, vmem_cap),
        ),
        cost_estimate=cost,
    )(x2d, w1b, b1r, w2b, b2r)

    return out2d[:M].reshape(B, S, H)


# ----------------------------------------------------------------------------
# Pure-JAX reference (same bf16-operand / f32-accumulate numerics)
# ----------------------------------------------------------------------------

def reference(x, w1, b1, w2, b2, approximate_gelu=True):
    xb = x.astype(jnp.bfloat16)
    h = jnp.dot(xb, w1.astype(jnp.bfloat16),
                preferred_element_type=jnp.float32) + b1.reshape(1, -1)
    h = jax.nn.gelu(h, approximate=approximate_gelu)
    y = jnp.dot(h.astype(jnp.bfloat16), w2.astype(jnp.bfloat16),
                preferred_element_type=jnp.float32) + b2.reshape(1, -1)
    return (y + x.astype(jnp.float32)).astype(x.dtype)


if __name__ == "__main__":
    # Small but lane-dense shapes (H multiple of 128 -> unmasked stores, full
    # MXU contraction width).
    B, S, H = 2, 64, 128
    F = 4 * H  # 512

    key = jax.random.PRNGKey(0)
    kx, k1, k2, k3, k4 = jax.random.split(key, 5)

    x = jax.random.normal(kx, (B, S, H), dtype=jnp.float32)
    w1 = jax.random.normal(k1, (H, F), dtype=jnp.float32) * (1.0 / jnp.sqrt(H))
    b1 = jax.random.normal(k2, (F,), dtype=jnp.float32) * 0.01
    w2 = jax.random.normal(k3, (F, H), dtype=jnp.float32) * (1.0 / jnp.sqrt(F))
    b2 = jax.random.normal(k4, (H,), dtype=jnp.float32) * 0.01

    ref = reference(x, w1, b1, w2, b2)

    # Auto-tiled path (weights resident in VMEM at this size).
    out = net_residual_add(x, w1, b1, w2, b2)
    jax.block_until_ready(out)
    assert out.shape == x.shape and out.dtype == x.dtype
    err = float(jnp.max(jnp.abs(out - ref)))
    assert jnp.allclose(out, ref, atol=2e-3, rtol=2e-3), f"resident path mismatch (max err {err})"

    # Forced F-streaming path (exercises the reduction grid axis + accumulator).
    out2 = net_residual_add(x, w1, b1, w2, b2, tm=64, tf=256, force_reduction=True)
    jax.block_until_ready(out2)
    err2 = float(jnp.max(jnp.abs(out2 - ref)))
    assert jnp.allclose(out2, ref, atol=2e-3, rtol=2e-3), f"streaming path mismatch (max err {err2})"

    print("KERNEL_OK")
</pallas_src>

<mosaic_0001>
module attributes {stable_mosaic.version = 11 : i64} {
  func.func @_ffn_residual_fused_kernel(%arg0: i32, %arg1: memref<128x128xf32, #tpu.memory_space<vmem>>, %arg2: memref<128x512xbf16, #tpu.memory_space<vmem>>, %arg3: memref<1x512xf32, #tpu.memory_space<vmem>>, %arg4: memref<512x128xbf16, #tpu.memory_space<vmem>>, %arg5: memref<1x128xf32, #tpu.memory_space<vmem>>, %arg6: memref<128x128xf32, #tpu.memory_space<vmem>>) attributes {dimension_semantics = [#tpu.dimension_semantics<parallel>], iteration_bounds = array<i64: 1>, scalar_prefetch = 0 : i64, scratch_operands = 0 : i64, tpu.core_type = #tpu.core_type<tc>, window_params = [{transform_indices = @transform_0, window_bounds = array<i64: 128, 128>}, {pipeline_mode = #tpu.pipeline_mode<synchronous>, transform_indices = @transform_1, window_bounds = array<i64: 128, 512>}, {pipeline_mode = #tpu.pipeline_mode<synchronous>, transform_indices = @transform_2, window_bounds = array<i64: 1, 512>}, {pipeline_mode = #tpu.pipeline_mode<synchronous>, transform_indices = @transform_3, window_bounds = array<i64: 512, 128>}, {pipeline_mode = #tpu.pipeline_mode<synchronous>, transform_indices = @transform_4, window_bounds = array<i64: 1, 128>}, {transform_indices = @transform_5, window_bounds = array<i64: 128, 128>}]} {
    %c0 = arith.constant 0 : index
    %c0_0 = arith.constant 0 : index
    %0 = vector.load %arg1[%c0, %c0_0] : memref<128x128xf32, #tpu.memory_space<vmem>>, vector<128x128xf32>
    %1 = arith.truncf %0 : vector<128x128xf32> to vector<128x128xbf16>
    %c0_1 = arith.constant 0 : index
    %c0_2 = arith.constant 0 : index
    %2 = vector.load %arg2[%c0_1, %c0_2] : memref<128x512xbf16, #tpu.memory_space<vmem>>, vector<128x512xbf16>
    %cst = arith.constant dense<0.000000e+00> : vector<128x512xf32>
    %3 = tpu.matmul %1, %2, %cst {dimension_numbers = #tpu.dot_dimension_numbers<[1], [0], [0], [1], [0, 0, 1, 1], [], []>} : vector<128x128xbf16>, vector<128x512xbf16>, vector<128x512xf32> -> vector<128x512xf32>
    %c0_3 = arith.constant 0 : index
    %c0_4 = arith.constant 0 : index
    %4 = vector.load %arg3[%c0_3, %c0_4] : memref<1x512xf32, #tpu.memory_space<vmem>>, vector<1x512xf32>
    %5 = vector.broadcast %4 : vector<1x512xf32> to vector<128x512xf32>
    %6 = arith.addf %3, %5 : vector<128x512xf32>
    %7 = arith.mulf %6, %6 : vector<128x512xf32>
    %8 = arith.mulf %6, %7 : vector<128x512xf32>
    %cst_5 = arith.constant 4.471500e-02 : f32
    %9 = vector.broadcast %cst_5 : f32 to vector<128x512xf32>
    %10 = arith.mulf %9, %8 : vector<128x512xf32>
    %11 = arith.addf %6, %10 : vector<128x512xf32>
    %cst_6 = arith.constant 0.797884583 : f32
    %12 = vector.broadcast %cst_6 : f32 to vector<128x512xf32>
    %13 = arith.mulf %12, %11 : vector<128x512xf32>
    %14 = math.tanh %13 : vector<128x512xf32>
    %cst_7 = arith.constant 1.000000e+00 : f32
    %15 = vector.broadcast %cst_7 : f32 to vector<128x512xf32>
    %16 = arith.addf %15, %14 : vector<128x512xf32>
    %cst_8 = arith.constant 5.000000e-01 : f32
    %17 = vector.broadcast %cst_8 : f32 to vector<128x512xf32>
    %18 = arith.mulf %17, %16 : vector<128x512xf32>
    %19 = arith.mulf %6, %18 : vector<128x512xf32>
    %20 = arith.truncf %19 : vector<128x512xf32> to vector<128x512xbf16>
    %c0_9 = arith.constant 0 : index
    %c0_10 = arith.constant 0 : index
    %21 = vector.load %arg4[%c0_9, %c0_10] : memref<512x128xbf16, #tpu.memory_space<vmem>>, vector<512x128xbf16>
    %cst_11 = arith.constant dense<0.000000e+00> : vector<128x128xf32>
    %22 = tpu.matmul %20, %21, %cst_11 {dimension_numbers = #tpu.dot_dimension_numbers<[1], [0], [0], [1], [0, 0, 1, 1], [], []>} : vector<128x512xbf16>, vector<512x128xbf16>, vector<128x128xf32> -> vector<128x128xf32>
    %c0_12 = arith.constant 0 : index
    %c0_13 = arith.constant 0 : index
    %23 = vector.load %arg5[%c0_12, %c0_13] : memref<1x128xf32, #tpu.memory_space<vmem>>, vector<1x128xf32>
    %24 = vector.broadcast %23 : vector<1x128xf32> to vector<128x128xf32>
    %25 = arith.addf %22, %24 : vector<128x128xf32>
    %26 = arith.addf %25, %0 : vector<128x128xf32>
    %c0_14 = arith.constant 0 : index
    %c0_15 = arith.constant 0 : index
    %27 = vector.load %arg6[%c0_14, %c0_15] : memref<128x128xf32, #tpu.memory_space<vmem>>, vector<128x128xf32>
    tpu.vector_store %arg6[%c0_14, %c0_15], %26 {strides = array<i32>} : memref<128x128xf32, #tpu.memory_space<vmem>>, vector<128x128xf32>,
    return
  }
  func.func @transform_0(%arg0: i32) -> (i32, i32) {
    %c0_i32 = arith.constant 0 : i32
    %c0_i32_0 = arith.constant 0 : i32
    return %arg0, %c0_i32 : i32, i32
  }
  func.func @transform_1(%arg0: i32) -> (i32, i32) {
    %c0_i32 = arith.constant 0 : i32
    %c0_i32_0 = arith.constant 0 : i32
    %c0_i32_1 = arith.constant 0 : i32
    return %c0_i32, %c0_i32_0 : i32, i32
  }
  func.func @transform_2(%arg0: i32) -> (i32, i32) {
    %c0_i32 = arith.constant 0 : i32
    %c0_i32_0 = arith.constant 0 : i32
    %c0_i32_1 = arith.constant 0 : i32
    return %c0_i32, %c0_i32_0 : i32, i32
  }
  func.func @transform_3(%arg0: i32) -> (i32, i32) {
    %c0_i32 = arith.constant 0 : i32
    %c0_i32_0 = arith.constant 0 : i32
    %c0_i32_1 = arith.constant 0 : i32
    return %c0_i32, %c0_i32_0 : i32, i32
  }
  func.func @transform_4(%arg0: i32) -> (i32, i32) {
    %c0_i32 = arith.constant 0 : i32
    %c0_i32_0 = arith.constant 0 : i32
    %c0_i32_1 = arith.constant 0 : i32
    return %c0_i32, %c0_i32_0 : i32, i32
  }
  func.func @transform_5(%arg0: i32) -> (i32, i32) {
    %c0_i32 = arith.constant 0 : i32
    %c0_i32_0 = arith.constant 0 : i32
    return %arg0, %c0_i32 : i32, i32
  }
}

</mosaic_0001>

<llo_original>
// kernel: tpu_custom_call.1
$region0: #{tpu_custom_call.1}
  #allocation0 [shape = 'u32[]', space=smem, size = 0x4, offset = 0x4, fixed_abs, tag = 'smem constant byte address 0x4 - core index']
  #allocation1 [shape = 'u32[144,128]{1,0:T(1,128)}', space=vmem, size = 0x12000, scoped, tag = 'internal scratch']
  %s0 = inlined_call_operand.hbm [shape: f32[128,128], index: 0, kind: input, shape index: {}]
  %s1 = inlined_call_operand.hbm [shape: bf16[128,512], index: 1, kind: input, shape index: {}]
  %s2 = inlined_call_operand.hbm [shape: f32[1,512], index: 2, kind: input, shape index: {}]
  %s3 = inlined_call_operand.hbm [shape: bf16[512,128], index: 3, kind: input, shape index: {}]
  %s4 = inlined_call_operand.vmem [shape: f32[1,128], index: 4, kind: input, shape index: {}]
  %s5 = inlined_call_operand.hbm [shape: f32[128,128], index: 5, kind: output, shape index: {}]
  %s6 = sld [smem:[#allocation0]]
  $region46: #{tpu_custom_call.1} parent=0
    _
  %s8 = ssub.s32 1, %s6
  %s9 = scalar_select 0, %s8, %s6
  $region1: #{tpu_custom_call.1} parent=0
    #allocation2 [shape = 'u8[65536]{0}', space=vmem, size = 0x10000, scoped, tag = 'input window, operand 0, single buffered']
    #allocation3 [shape = 's32[1]{0}', space=sflag, size = 0x4, scoped, tag = 'scoped memory for tpu_custom_call.1']
    #allocation4 [shape = 's32[1]{0}', space=sflag, size = 0x4, scoped, tag = 'scoped memory for tpu_custom_call.1']
    #allocation5 [shape = 'u8[131072]{0}', space=vmem, size = 0x20000, scoped, tag = 'input window, operand 1, single buffered']
    #allocation6 [shape = 's32[1]{0}', space=sflag, size = 0x4, scoped, tag = 'scoped memory for tpu_custom_call.1']
    #allocation7 [shape = 'u8[2048]{0}', space=vmem, size = 0x800, scoped, tag = 'input window, operand 2, single buffered']
    #allocation8 [shape = 'u8[131072]{0}', space=vmem, size = 0x20000, scoped, tag = 'input window, operand 3, single buffered']
    #allocation9 [shape = 's32[1]{0}', space=sflag, size = 0x4, scoped, tag = 'scoped memory for tpu_custom_call.1']
    #allocation10 [shape = 'u8[65536]{0}', space=vmem, size = 0x10000, scoped, tag = 'output window, operand 0, single buffered']
    %10 = vsyncpa [#allocation3], 0
    %11 = vsyncpa [#allocation6], 0
    %12 = vsyncpa [#allocation9], 0
    %13 = vsyncpa [#allocation4], 0
    // Predicated region
    $region2: #{tpu_custom_call.1} parent=1 // pred_check
      _
    $region3: #{tpu_custom_call.1} parent=1 // pred_check_branch
      %15 = sbr.rel (0) target = $region5
    $region4: #{tpu_custom_call.1} parent=1 // pred_region
      %s17 = ssub.s32 2048, 2048
      %18 = vsyncadd [#allocation3], %s17
      %s19 = sshll.u32 [#allocation2], 4
      %s20 = int_to_ptr.vmem [resolvable:$true] %s19
      %25 = dma.hbm_to_vmem [thread:$0]  %s0, 2048, %s20, [#allocation3], 128, 128, 8
    $region5: #{tpu_custom_call.1} parent=1 // pred_fallthru
      _
    // Predicated region
    $region6: #{tpu_custom_call.1} parent=1 // pred_check
      _
    $region7: #{tpu_custom_call.1} parent=1 // pred_check_branch
      %27 = sbr.rel (0) target = $region9
    $region8: #{tpu_custom_call.1} parent=1 // pred_region
      %s29 = ssub.s32 4096, 4096
      %30 = vsyncadd [#allocation6], %s29
      %s31 = sshll.u32 [#allocation5], 4
      %s32 = int_to_ptr.vmem [resolvable:$true] %s31
      %37 = dma.hbm_to_vmem [thread:$0]  %s1, 4096, %s32, [#allocation6], 256, 256, 16
    $region9: #{tpu_custom_call.1} parent=1 // pred_fallthru
      _
    // Predicated region
    $region10: #{tpu_custom_call.1} parent=1 // pred_check
      _
    $region11: #{tpu_custom_call.1} parent=1 // pred_check_branch
      %39 = sbr.rel (0) target = $region13
    $region12: #{tpu_custom_call.1} parent=1 // pred_region
      %s41 = ssub.s32 64, 64
      %42 = vsyncadd [#allocation6], %s41
      %s44 = sshll.u32 [#allocation7], 4
      %s45 = int_to_ptr.vmem [resolvable:$true] %s44
      %47 = dma.hbm_to_vmem [thread:$0]  %s2, 64, %s45, [#allocation6]
    $region13: #{tpu_custom_call.1} parent=1 // pred_fallthru
      _
    // Predicated region
    $region14: #{tpu_custom_call.1} parent=1 // pred_check
      _
    $region15: #{tpu_custom_call.1} parent=1 // pred_check_branch
      %49 = sbr.rel (0) target = $region17
    $region16: #{tpu_custom_call.1} parent=1 // pred_region
      %s51 = ssub.s32 4096, 4096
      %52 = vsyncadd [#allocation9], %s51
      %s53 = sshll.u32 [#allocation8], 4
      %s54 = int_to_ptr.vmem [resolvable:$true] %s53
      %59 = dma.hbm_to_vmem [thread:$0]  %s3, 4096, %s54, [#allocation9], 64, 64, 4
    $region17: #{tpu_custom_call.1} parent=1 // pred_fallthru
      _
    // Predicated region
    $region18: #{tpu_custom_call.1} parent=1 // pred_check
      _
    $region19: #{tpu_custom_call.1} parent=1 // pred_check_branch
      %61 = sbr.rel (0) target = $region21
    $region20: #{tpu_custom_call.1} parent=1 // pred_region
      _
    $region21: #{tpu_custom_call.1} parent=1 // pred_fallthru
      _
    // Predicated region
    $region22: #{tpu_custom_call.1} parent=1 // pred_check
      _
    $region23: #{tpu_custom_call.1} parent=1 // pred_check_branch
      %63 = sbr.rel (0) target = $region25
    $region24: #{tpu_custom_call.1} parent=1 // pred_region
      %64 = dma.done [#allocation3], 2048
    $region25: #{tpu_custom_call.1} parent=1 // pred_fallthru
      _
    // Predicated region
    $region26: #{tpu_custom_call.1} parent=1 // pred_check
      _
    $region27: #{tpu_custom_call.1} parent=1 // pred_check_branch
      %66 = sbr.rel (0) target = $region29
    $region28: #{tpu_custom_call.1} parent=1 // pred_region
      %67 = dma.done [#allocation6], 4096
    $region29: #{tpu_custom_call.1} parent=1 // pred_fallthru
      _
    // Predicated region
    $region30: #{tpu_custom_call.1} parent=1 // pred_check
      _
    $region31: #{tpu_custom_call.1} parent=1 // pred_check_branch
      %69 = sbr.rel (0) target = $region33
    $region32: #{tpu_custom_call.1} parent=1 // pred_region
      %70 = dma.done [#allocation6], 64
    $region33: #{tpu_custom_call.1} parent=1 // pred_fallthru
      _
    // Predicated region
    $region34: #{tpu_custom_call.1} parent=1 // pred_check
      _
    $region35: #{tpu_custom_call.1} parent=1 // pred_check_branch
      %72 = sbr.rel (0) target = $region37
    $region36: #{tpu_custom_call.1} parent=1 // pred_region
      %73 = dma.done [#allocation9], 4096
    $region37: #{tpu_custom_call.1} parent=1 // pred_fallthru
      _
    %v75 = vld [vmem:[#allocation2] sm:$0xff]
    %v76 = vld [vmem:[#allocation2 + $0x8] sm:$0xff]
    %v77 = vld [vmem:[#allocation2 + $0x10] sm:$0xff]
    %v78 = vld [vmem:[#allocation2 + $0x18] sm:$0xff]
    %v79 = vld [vmem:[#allocation2 + $0x20] sm:$0xff]
    %v80 = vld [vmem:[#allocation2 + $0x28] sm:$0xff]
    %v81 = vld [vmem:[#allocation2 + $0x30] sm:$0xff]
    %v82 = vld [vmem:[#allocation2 + $0x38] sm:$0xff]
    %v83 = vld [vmem:[#allocation2 + $0x40] sm:$0xff]
    %v84 = vld [vmem:[#allocation2 + $0x48] sm:$0xff]
    %v85 = vld [vmem:[#allocation2 + $0x50] sm:$0xff]
    %v86 = vld [vmem:[#allocation2 + $0x58] sm:$0xff]
    %v87 = vld [vmem:[#allocation2 + $0x60] sm:$0xff]
    %v88 = vld [vmem:[#allocation2 + $0x68] sm:$0xff]
    %v89 = vld [vmem:[#allocation2 + $0x70] sm:$0xff]
    %v90 = vld [vmem:[#allocation2 + $0x78] sm:$0xff]
    %v91 = vpack.c.bf16 %v76, %v75
    %v92 = vpack.c.bf16 %v78, %v77
    %v93 = vpack.c.bf16 %v80, %v79
    %v94 = vpack.c.bf16 %v82, %v81
    %v95 = vpack.c.bf16 %v84, %v83
    %v96 = vpack.c.bf16 %v86, %v85
    %v97 = vpack.c.bf16 %v88, %v87
    %v98 = vpack.c.bf16 %v90, %v89
    %v99 = vld [vmem:[#allocation5] sm:$0xff]
    %v100 = vld [vmem:[#allocation5 + $0x8] sm:$0xff]
    %v101 = vld [vmem:[#allocation5 + $0x10] sm:$0xff]
    %v102 = vld [vmem:[#allocation5 + $0x18] sm:$0xff]
    %v103 = vld [vmem:[#allocation5 + $0x20] sm:$0xff]
    %v104 = vld [vmem:[#allocation5 + $0x28] sm:$0xff]
    %v105 = vld [vmem:[#allocation5 + $0x30] sm:$0xff]
    %v106 = vld [vmem:[#allocation5 + $0x38] sm:$0xff]
    %v107 = vld [vmem:[#allocation5 + $0x40] sm:$0xff]
    %v108 = vld [vmem:[#allocation5 + $0x48] sm:$0xff]
    %v109 = vld [vmem:[#allocation5 + $0x50] sm:$0xff]
    %v110 = vld [vmem:[#allocation5 + $0x58] sm:$0xff]
    %v111 = vld [vmem:[#allocation5 + $0x60] sm:$0xff]
    %v112 = vld [vmem:[#allocation5 + $0x68] sm:$0xff]
    %v113 = vld [vmem:[#allocation5 + $0x70] sm:$0xff]
    %v114 = vld [vmem:[#allocation5 + $0x78] sm:$0xff]
    %v115 = vld [vmem:[#allocation5 + $0x80] sm:$0xff]
    %v116 = vld [vmem:[#allocation5 + $0x88] sm:$0xff]
    %v117 = vld [vmem:[#allocation5 + $0x90] sm:$0xff]
    %v118 = vld [vmem:[#allocation5 + $0x98] sm:$0xff]
    %v119 = vld [vmem:[#allocation5 + $0xa0] sm:$0xff]
    %v120 = vld [vmem:[#allocation5 + $0xa8] sm:$0xff]
    %v121 = vld [vmem:[#allocation5 + $0xb0] sm:$0xff]
    %v122 = vld [vmem:[#allocation5 + $0xb8] sm:$0xff]
    %v123 = vld [vmem:[#allocation5 + $0xc0] sm:$0xff]
    %v124 = vld [vmem:[#allocation5 + $0xc8] sm:$0xff]
    %v125 = vld [vmem:[#allocation5 + $0xd0] sm:$0xff]
    %v126 = vld [vmem:[#allocation5 + $0xd8] sm:$0xff]
    %v127 = vld [vmem:[#allocation5 + $0xe0] sm:$0xff]
    %v128 = vld [vmem:[#allocation5 + $0xe8] sm:$0xff]
    %v129 = vld [vmem:[#allocation5 + $0xf0] sm:$0xff]
    %v130 = vld [vmem:[#allocation5 + $0xf8] sm:$0xff]
    %v131 = vld [vmem:[#allocation7] sm:$0xf]
    %v133 = vlaneseq
    %v134 = vshrl.u32 %v133, 7
    %v135 = vsub.s32 0, %v134
    %v136 = vrot.slane %v131, %v135
    %v137 = vlaneseq
    %v138 = vshrl.u32 %v137, 7
    %v139 = vsub.s32 1, %v138
    %v140 = vrot.slane %v131, %v139
    %v141 = vlaneseq
    %v142 = vshrl.u32 %v141, 7
    %v143 = vsub.s32 2, %v142
    %v144 = vrot.slane %v131, %v143
    %v145 = vlaneseq
    %v146 = vshrl.u32 %v145, 7
    %v147 = vsub.s32 3, %v146
    %v148 = vrot.slane %v131, %v147
    %v185 = vunpack.c.l.b16 %v99
    %v186 = vunpack.c.h.b16 %v99
    %v187 = vunpack.c.l.b16 %v100
    %v188 = vunpack.c.h.b16 %v100
    %v189 = vunpack.c.l.b16 %v101
    %v190 = vunpack.c.h.b16 %v101
    %v191 = vunpack.c.l.b16 %v102
    %v192 = vunpack.c.h.b16 %v102
    %v193 = vunpack.c.l.b16 %v103
    %v194 = vunpack.c.h.b16 %v103
    %v195 = vunpack.c.l.b16 %v104
    %v196 = vunpack.c.h.b16 %v104
    %v197 = vunpack.c.l.b16 %v105
    %v198 = vunpack.c.h.b16 %v105
    %v199 = vunpack.c.l.b16 %v106
    %v200 = vunpack.c.h.b16 %v106
    %v201 = vunpack.c.l.b16 %v107
    %v202 = vunpack.c.h.b16 %v107
    %v203 = vunpack.c.l.b16 %v108
    %v204 = vunpack.c.h.b16 %v108
    %v205 = vunpack.c.l.b16 %v109
    %v206 = vunpack.c.h.b16 %v109
    %v207 = vunpack.c.l.b16 %v110
    %v208 = vunpack.c.h.b16 %v110
    %v209 = vunpack.c.l.b16 %v111
    %v210 = vunpack.c.h.b16 %v111
    %v211 = vunpack.c.l.b16 %v112
    %v212 = vunpack.c.h.b16 %v112
    %v213 = vunpack.c.l.b16 %v113
    %v214 = vunpack.c.h.b16 %v113
    %v215 = vunpack.c.l.b16 %v114
    %v216 = vunpack.c.h.b16 %v114
    %v217 = vunpack.c.l.b16 %v115
    %v218 = vunpack.c.h.b16 %v115
    %v219 = vunpack.c.l.b16 %v116
    %v220 = vunpack.c.h.b16 %v116
    %v221 = vunpack.c.l.b16 %v117
    %v222 = vunpack.c.h.b16 %v117
    %v223 = vunpack.c.l.b16 %v118
    %v224 = vunpack.c.h.b16 %v118
    %v225 = vunpack.c.l.b16 %v119
    %v226 = vunpack.c.h.b16 %v119
    %v227 = vunpack.c.l.b16 %v120
    %v228 = vunpack.c.h.b16 %v120
    %v229 = vunpack.c.l.b16 %v121
    %v230 = vunpack.c.h.b16 %v121
    %v231 = vunpack.c.l.b16 %v122
    %v232 = vunpack.c.h.b16 %v122
    %v233 = vunpack.c.l.b16 %v123
    %v234 = vunpack.c.h.b16 %v123
    %v235 = vunpack.c.l.b16 %v124
    %v236 = vunpack.c.h.b16 %v124
    %v237 = vunpack.c.l.b16 %v125
    %v238 = vunpack.c.h.b16 %v125
    %v239 = vunpack.c.l.b16 %v126
    %v240 = vunpack.c.h.b16 %v126
    %v241 = vunpack.c.l.b16 %v127
    %v242 = vunpack.c.h.b16 %v127
    %v243 = vunpack.c.l.b16 %v128
    %v244 = vunpack.c.h.b16 %v128
    %v245 = vunpack.c.l.b16 %v129
    %v246 = vunpack.c.h.b16 %v129
    %v247 = vunpack.c.l.b16 %v130
    %v248 = vunpack.c.h.b16 %v130
    %v249 = vpack.c.b16 %v189, %v185
    %v250 = vpack.c.b16 %v190, %v186
    %v251 = vpack.c.b16 %v191, %v187
    %v252 = vpack.c.b16 %v192, %v188
    %v253 = vpack.c.b16 %v197, %v193
    %v254 = vpack.c.b16 %v198, %v194
    %v255 = vpack.c.b16 %v199, %v195
    %v256 = vpack.c.b16 %v200, %v196
    %v257 = vpack.c.b16 %v205, %v201
    %v258 = vpack.c.b16 %v206, %v202
    %v259 = vpack.c.b16 %v207, %v203
    %v260 = vpack.c.b16 %v208, %v204
    %v261 = vpack.c.b16 %v213, %v209
    %v262 = vpack.c.b16 %v214, %v210
    %v263 = vpack.c.b16 %v215, %v211
    %v264 = vpack.c.b16 %v216, %v212
    %v265 = vpack.c.b16 %v221, %v217
    %v266 = vpack.c.b16 %v222, %v218
    %v267 = vpack.c.b16 %v223, %v219
    %v268 = vpack.c.b16 %v224, %v220
    %v269 = vpack.c.b16 %v229, %v225
    %v270 = vpack.c.b16 %v230, %v226
    %v271 = vpack.c.b16 %v231, %v227
    %v272 = vpack.c.b16 %v232, %v228
    %v273 = vpack.c.b16 %v237, %v233
    %v274 = vpack.c.b16 %v238, %v234
    %v275 = vpack.c.b16 %v239, %v235
    %v276 = vpack.c.b16 %v240, %v236
    %v277 = vpack.c.b16 %v245, %v241
    %v278 = vpack.c.b16 %v246, %v242
    %v279 = vpack.c.b16 %v247, %v243
    %v280 = vpack.c.b16 %v248, %v244
    %313 = vmatprep.subr.bf16.mxu0 %v278
    %314 = vmatpush1.bf16.msra.mxu0 %v277
    %315 = vmatprep.subr.bf16.mxu0 %v274
    %316 = vmatpush1.bf16.msra.mxu0 %v273
    %317 = vmatprep.subr.bf16.mxu0 %v270
    %318 = vmatpush1.bf16.msra.mxu0 %v269
    %319 = vmatprep.subr.bf16.mxu0 %v266
    %320 = vmatpush1.bf16.msra.mxu0 %v265
    %321 = vmatprep.subr.bf16.mxu0 %v262
    %322 = vmatpush1.bf16.msra.mxu0 %v261
    %323 = vmatprep.subr.bf16.mxu0 %v258
    %324 = vmatpush1.bf16.msra.mxu0 %v257
    %325 = vmatprep.subr.bf16.mxu0 %v254
    %326 = vmatpush1.bf16.msra.mxu0 %v253
    %327 = vmatprep.subr.bf16.mxu0 %v250
    %328 = vmatpush1.bf16.msra.mxu0 %v249
    %329 = vmatprep.subr.bf16.mxu0 0
    %330 = vmatpush2.bf16.msra.mxu0 0
    %331 = vmatprep.subr.bf16.mxu0 0
    %332 = vmatpush2.bf16.msra.mxu0 0
    %333 = vmatprep.subr.bf16.mxu0 0
    %334 = vmatpush2.bf16.msra.mxu0 0
    %335 = vmatprep.subr.bf16.mxu0 0
    %336 = vmatpush2.bf16.msra.mxu0 0
    %337 = vmatprep.subr.bf16.mxu0 0
    %338 = vmatpush2.bf16.msra.mxu0 0
    %339 = vmatprep.subr.bf16.mxu0 0
    %340 = vmatpush2.bf16.msra.mxu0 0
    %341 = vmatprep.subr.bf16.mxu0 0
    %342 = vmatpush2.bf16.msra.mxu0 0
    %343 = vmatprep.subr.bf16.mxu0 0
    %344 = vmatpush2.bf16.msra.mxu0 0
    %345 = vmatprep.mubr.bf16.mxu0 0
    %346 = vmatmul.mubr.bf16.gmra.mxu0 %v91
    %v347 = vpop.f32.mrf.mxu0
    %v348 = vadd.f32 %v136, %v347
    %v349 = vpop.f32.mrf.mxu0
    %v350 = vadd.f32 %v140, %v349
    %v351 = vpop.f32.mrf.mxu0
    %v352 = vadd.f32 %v136, %v351
    %v353 = vpop.f32.mrf.mxu0
    %v354 = vadd.f32 %v140, %v353
    %355 = vmatprep.mubr.bf16.mxu0 0
    %356 = vmatmul.mubr.bf16.gmra.mxu0 %v92
    %v357 = vpop.f32.mrf.mxu0
    %v358 = vadd.f32 %v136, %v357
    %v359 = vpop.f32.mrf.mxu0
    %v360 = vadd.f32 %v140, %v359
    %v361 = vpop.f32.mrf.mxu0
    %v362 = vadd.f32 %v136, %v361
    %v363 = vpop.f32.mrf.mxu0
    %v364 = vadd.f32 %v140, %v363
    %365 = vmatprep.mubr.bf16.mxu0 0
    %366 = vmatmul.mubr.bf16.gmra.mxu0 %v93
    %v367 = vpop.f32.mrf.mxu0
    %v368 = vadd.f32 %v136, %v367
    %v369 = vpop.f32.mrf.mxu0
    %v370 = vadd.f32 %v140, %v369
    %v371 = vpop.f32.mrf.mxu0
    %v372 = vadd.f32 %v136, %v371
    %v373 = vpop.f32.mrf.mxu0
    %v374 = vadd.f32 %v140, %v373
    %375 = vmatprep.mubr.bf16.mxu0 0
    %376 = vmatmul.mubr.bf16.gmra.mxu0 %v94
    %v377 = vpop.f32.mrf.mxu0
    %v378 = vadd.f32 %v136, %v377
    %v379 = vpop.f32.mrf.mxu0
    %v380 = vadd.f32 %v140, %v379
    %v381 = vpop.f32.mrf.mxu0
    %v382 = vadd.f32 %v136, %v381
    %v383 = vpop.f32.mrf.mxu0
    %v384 = vadd.f32 %v140, %v383
    %385 = vmatprep.mubr.bf16.mxu0 0
    %386 = vmatmul.mubr.bf16.gmra.mxu0 %v95
    %v387 = vpop.f32.mrf.mxu0
    %v388 = vadd.f32 %v136, %v387
    %v389 = vpop.f32.mrf.mxu0
    %v390 = vadd.f32 %v140, %v389
    %v391 = vpop.f32.mrf.mxu0
    %v392 = vadd.f32 %v136, %v391
    %v393 = vpop.f32.mrf.mxu0
    %v394 = vadd.f32 %v140, %v393
    %395 = vmatprep.mubr.bf16.mxu0 0
    %396 = vmatmul.mubr.bf16.gmra.mxu0 %v96
    %v397 = vpop.f32.mrf.mxu0
    %v398 = vadd.f32 %v136, %v397
    %v399 = vpop.f32.mrf.mxu0
    %v400 = vadd.f32 %v140, %v399
    %v401 = vpop.f32.mrf.mxu0
    %v402 = vadd.f32 %v136, %v401
    %v403 = vpop.f32.mrf.mxu0
    %v404 = vadd.f32 %v140, %v403
    %405 = vmatprep.mubr.bf16.mxu0 0
    %406 = vmatmul.mubr.bf16.gmra.mxu0 %v97
    %v407 = vpop.f32.mrf.mxu0
    %v408 = vadd.f32 %v136, %v407
    %v409 = vpop.f32.mrf.mxu0
    %v410 = vadd.f32 %v140, %v409
    %v411 = vpop.f32.mrf.mxu0
    %v412 = vadd.f32 %v136, %v411
    %v413 = vpop.f32.mrf.mxu0
    %v414 = vadd.f32 %v140, %v413
    %415 = vmatprep.mubr.bf16.mxu0 0
    %416 = vmatmul.mubr.bf16.gmra.mxu0 %v98
    %v417 = vpop.f32.mrf.mxu0
    %v418 = vadd.f32 %v136, %v417
    %v419 = vpop.f32.mrf.mxu0
    %v420 = vadd.f32 %v140, %v419
    %v421 = vpop.f32.mrf.mxu0
    %v422 = vadd.f32 %v136, %v421
    %v423 = vpop.f32.mrf.mxu0
    %v424 = vadd.f32 %v140, %v423
    %425 = vdwg.mxu0
    %426 = vmatprep.subr.bf16.mxu0 %v280
    %427 = vmatpush1.bf16.msra.mxu0 %v279
    %428 = vmatprep.subr.bf16.mxu0 %v276
    %429 = vmatpush1.bf16.msra.mxu0 %v275
    %430 = vmatprep.subr.bf16.mxu0 %v272
    %431 = vmatpush1.bf16.msra.mxu0 %v271
    %432 = vmatprep.subr.bf16.mxu0 %v268
    %433 = vmatpush1.bf16.msra.mxu0 %v267
    %434 = vmatprep.subr.bf16.mxu0 %v264
    %435 = vmatpush1.bf16.msra.mxu0 %v263
    %436 = vmatprep.subr.bf16.mxu0 %v260
    %437 = vmatpush1.bf16.msra.mxu0 %v259
    %438 = vmatprep.subr.bf16.mxu0 %v256
    %439 = vmatpush1.bf16.msra.mxu0 %v255
    %440 = vmatprep.subr.bf16.mxu0 %v252
    %441 = vmatpush1.bf16.msra.mxu0 %v251
    %442 = vmatprep.subr.bf16.mxu0 0
    %443 = vmatpush2.bf16.msra.mxu0 0
    %444 = vmatprep.subr.bf16.mxu0 0
    %445 = vmatpush2.bf16.msra.mxu0 0
    %446 = vmatprep.subr.bf16.mxu0 0
    %447 = vmatpush2.bf16.msra.mxu0 0
    %448 = vmatprep.subr.bf16.mxu0 0
    %449 = vmatpush2.bf16.msra.mxu0 0
    %450 = vmatprep.subr.bf16.mxu0 0
    %451 = vmatpush2.bf16.msra.mxu0 0
    %452 = vmatprep.subr.bf16.mxu0 0
    %453 = vmatpush2.bf16.msra.mxu0 0
    %454 = vmatprep.subr.bf16.mxu0 0
    %455 = vmatpush2.bf16.msra.mxu0 0
    %456 = vmatprep.subr.bf16.mxu0 0
    %457 = vmatpush2.bf16.msra.mxu0 0
    %458 = vmatprep.mubr.bf16.mxu0 0
    %459 = vmatmul.mubr.bf16.gmra.mxu0 %v91
    %v460 = vpop.f32.mrf.mxu0
    %v461 = vadd.f32 %v144, %v460
    %v462 = vpop.f32.mrf.mxu0
    %v463 = vadd.f32 %v148, %v462
    %v464 = vpop.f32.mrf.mxu0
    %v465 = vadd.f32 %v144, %v464
    %v466 = vpop.f32.mrf.mxu0
    %v467 = vadd.f32 %v148, %v466
    %468 = vmatprep.mubr.bf16.mxu0 0
    %469 = vmatmul.mubr.bf16.gmra.mxu0 %v92
    %v470 = vpop.f32.mrf.mxu0
    %v471 = vadd.f32 %v144, %v470
    %v472 = vpop.f32.mrf.mxu0
    %v473 = vadd.f32 %v148, %v472
    %v474 = vpop.f32.mrf.mxu0
    %v475 = vadd.f32 %v144, %v474
    %v476 = vpop.f32.mrf.mxu0
    %v477 = vadd.f32 %v148, %v476
    %478 = vmatprep.mubr.bf16.mxu0 0
    %479 = vmatmul.mubr.bf16.gmra.mxu0 %v93
    %v480 = vpop.f32.mrf.mxu0
    %v481 = vadd.f32 %v144, %v480
    %v482 = vpop.f32.mrf.mxu0
    %v483 = vadd.f32 %v148, %v482
    %v484 = vpop.f32.mrf.mxu0
    %v485 = vadd.f32 %v144, %v484
    %v486 = vpop.f32.mrf.mxu0
    %v487 = vadd.f32 %v148, %v486
    %488 = vmatprep.mubr.bf16.mxu0 0
    %489 = vmatmul.mubr.bf16.gmra.mxu0 %v94
    %v490 = vpop.f32.mrf.mxu0
    %v491 = vadd.f32 %v144, %v490
    %v492 = vpop.f32.mrf.mxu0
    %v493 = vadd.f32 %v148, %v492
    %v494 = vpop.f32.mrf.mxu0
    %v495 = vadd.f32 %v144, %v494
    %v496 = vpop.f32.mrf.mxu0
    %v497 = vadd.f32 %v148, %v496
    %498 = vmatprep.mubr.bf16.mxu0 0
    %499 = vmatmul.mubr.bf16.gmra.mxu0 %v95
    %v500 = vpop.f32.mrf.mxu0
    %v501 = vadd.f32 %v144, %v500
    %v502 = vpop.f32.mrf.mxu0
    %v503 = vadd.f32 %v148, %v502
    %v504 = vpop.f32.mrf.mxu0
    %v505 = vadd.f32 %v144, %v504
    %v506 = vpop.f32.mrf.mxu0
    %v507 = vadd.f32 %v148, %v506
    %508 = vmatprep.mubr.bf16.mxu0 0
    %509 = vmatmul.mubr.bf16.gmra.mxu0 %v96
    %v510 = vpop.f32.mrf.mxu0
    %v511 = vadd.f32 %v144, %v510
    %v512 = vpop.f32.mrf.mxu0
    %v513 = vadd.f32 %v148, %v512
    %v514 = vpop.f32.mrf.mxu0
    %v515 = vadd.f32 %v144, %v514
    %v516 = vpop.f32.mrf.mxu0
    %v517 = vadd.f32 %v148, %v516
    %518 = vmatprep.mubr.bf16.mxu0 0
    %519 = vmatmul.mubr.bf16.gmra.mxu0 %v97
    %v520 = vpop.f32.mrf.mxu0
    %v521 = vadd.f32 %v144, %v520
    %v522 = vpop.f32.mrf.mxu0
    %v523 = vadd.f32 %v148, %v522
    %v524 = vpop.f32.mrf.mxu0
    %v525 = vadd.f32 %v144, %v524
    %v526 = vpop.f32.mrf.mxu0
    %v527 = vadd.f32 %v148, %v526
    %528 = vmatprep.mubr.bf16.mxu0 0
    %529 = vmatmul.mubr.bf16.gmra.mxu0 %v98
    %v530 = vpop.f32.mrf.mxu0
    %v531 = vadd.f32 %v144, %v530
    %v532 = vpop.f32.mrf.mxu0
    %v533 = vadd.f32 %v148, %v532
    %v534 = vpop.f32.mrf.mxu0
    %v535 = vadd.f32 %v144, %v534
    %v536 = vpop.f32.mrf.mxu0
    %v537 = vadd.f32 %v148, %v536
    %538 = vdwg.mxu0
    %v539 = vmul.f32 %v348, %v348
    %v540 = vmul.f32 %v350, %v350
    %v541 = vmul.f32 %v461, %v461
    %v542 = vmul.f32 %v463, %v463
    %v543 = vmul.f32 %v352, %v352
    %v544 = vmul.f32 %v354, %v354
    %v545 = vmul.f32 %v465, %v465
    %v546 = vmul.f32 %v467, %v467
    %v547 = vmul.f32 %v358, %v358
    %v548 = vmul.f32 %v360, %v360
    %v549 = vmul.f32 %v471, %v471
    %v550 = vmul.f32 %v473, %v473
    %v551 = vmul.f32 %v362, %v362
    %v552 = vmul.f32 %v364, %v364
    %v553 = vmul.f32 %v475, %v475
    %v554 = vmul.f32 %v477, %v477
    %v555 = vmul.f32 %v368, %v368
    %v556 = vmul.f32 %v370, %v370
    %v557 = vmul.f32 %v481, %v481
    %v558 = vmul.f32 %v483, %v483
    %v559 = vmul.f32 %v372, %v372
    %v560 = vmul.f32 %v374, %v374
    %v561 = vmul.f32 %v485, %v485
    %v562 = vmul.f32 %v487, %v487
    %v563 = vmul.f32 %v378, %v378
    %v564 = vmul.f32 %v380, %v380
    %v565 = vmul.f32 %v491, %v491
    %v566 = vmul.f32 %v493, %v493
    %v567 = vmul.f32 %v382, %v382
    %v568 = vmul.f32 %v384, %v384
    %v569 = vmul.f32 %v495, %v495
    %v570 = vmul.f32 %v497, %v497
    %v571 = vmul.f32 %v388, %v388
    %v572 = vmul.f32 %v390, %v390
    %v573 = vmul.f32 %v501, %v501
    %v574 = vmul.f32 %v503, %v503
    %v575 = vmul.f32 %v392, %v392
    %v576 = vmul.f32 %v394, %v394
    %v577 = vmul.f32 %v505, %v505
    %v578 = vmul.f32 %v507, %v507
    %v579 = vmul.f32 %v398, %v398
    %v580 = vmul.f32 %v400, %v400
    %v581 = vmul.f32 %v511, %v511
    %v582 = vmul.f32 %v513, %v513
    %v583 = vmul.f32 %v402, %v402
    %v584 = vmul.f32 %v404, %v404
    %v585 = vmul.f32 %v515, %v515
    %v586 = vmul.f32 %v517, %v517
    %v587 = vmul.f32 %v408, %v408
    %v588 = vmul.f32 %v410, %v410
    %v589 = vmul.f32 %v521, %v521
    %v590 = vmul.f32 %v523, %v523
    %v591 = vmul.f32 %v412, %v412
    %v592 = vmul.f32 %v414, %v414
    %v593 = vmul.f32 %v525, %v525
    %v594 = vmul.f32 %v527, %v527
    %v595 = vmul.f32 %v418, %v418
    %v596 = vmul.f32 %v420, %v420
    %v597 = vmul.f32 %v531, %v531
    %v598 = vmul.f32 %v533, %v533
    %v599 = vmul.f32 %v422, %v422
    %v600 = vmul.f32 %v424, %v424
    %v601 = vmul.f32 %v535, %v535
    %v602 = vmul.f32 %v537, %v537
    %v603 = vmul.f32 %v348, %v539
    %v604 = vmul.f32 %v350, %v540
    %v605 = vmul.f32 %v461, %v541
    %v606 = vmul.f32 %v463, %v542
    %v607 = vmul.f32 %v352, %v543
    %v608 = vmul.f32 %v354, %v544
    %v609 = vmul.f32 %v465, %v545
    %v610 = vmul.f32 %v467, %v546
    %v611 = vmul.f32 %v358, %v547
    %v612 = vmul.f32 %v360, %v548
    %v613 = vmul.f32 %v471, %v549
    %v614 = vmul.f32 %v473, %v550
    %v615 = vmul.f32 %v362, %v551
    %v616 = vmul.f32 %v364, %v552
    %v617 = vmul.f32 %v475, %v553
    %v618 = vmul.f32 %v477, %v554
    %v619 = vmul.f32 %v368, %v555
    %v620 = vmul.f32 %v370, %v556
    %v621 = vmul.f32 %v481, %v557
    %v622 = vmul.f32 %v483, %v558
    %v623 = vmul.f32 %v372, %v559
    %v624 = vmul.f32 %v374, %v560
    %v625 = vmul.f32 %v485, %v561
    %v626 = vmul.f32 %v487, %v562
    %v627 = vmul.f32 %v378, %v563
    %v628 = vmul.f32 %v380, %v564
    %v629 = vmul.f32 %v491, %v565
    %v630 = vmul.f32 %v493, %v566
    %v631 = vmul.f32 %v382, %v567
    %v632 = vmul.f32 %v384, %v568
    %v633 = vmul.f32 %v495, %v569
    %v634 = vmul.f32 %v497, %v570
    %v635 = vmul.f32 %v388, %v571
    %v636 = vmul.f32 %v390, %v572
    %v637 = vmul.f32 %v501, %v573
    %v638 = vmul.f32 %v503, %v574
    %v639 = vmul.f32 %v392, %v575
    %v640 = vmul.f32 %v394, %v576
    %v641 = vmul.f32 %v505, %v577
    %v642 = vmul.f32 %v507, %v578
    %v643 = vmul.f32 %v398, %v579
    %v644 = vmul.f32 %v400, %v580
    %v645 = vmul.f32 %v511, %v581
    %v646 = vmul.f32 %v513, %v582
    %v647 = vmul.f32 %v402, %v583
    %v648 = vmul.f32 %v404, %v584
    %v649 = vmul.f32 %v515, %v585
    %v650 = vmul.f32 %v517, %v586
    %v651 = vmul.f32 %v408, %v587
    %v652 = vmul.f32 %v410, %v588
    %v653 = vmul.f32 %v521, %v589
    %v654 = vmul.f32 %v523, %v590
    %v655 = vmul.f32 %v412, %v591
    %v656 = vmul.f32 %v414, %v592
    %v657 = vmul.f32 %v525, %v593
    %v658 = vmul.f32 %v527, %v594
    %v659 = vmul.f32 %v418, %v595
    %v660 = vmul.f32 %v420, %v596
    %v661 = vmul.f32 %v531, %v597
    %v662 = vmul.f32 %v533, %v598
    %v663 = vmul.f32 %v422, %v599
    %v664 = vmul.f32 %v424, %v600
    %v665 = vmul.f32 %v535, %v601
    %v666 = vmul.f32 %v537, %v602
    %v667 = vmul.f32 %v603, 0.044715
    %v668 = vmul.f32 %v604, 0.044715
    %v669 = vmul.f32 %v605, 0.044715
    %v670 = vmul.f32 %v606, 0.044715
    %v671 = vmul.f32 %v607, 0.044715
    %v672 = vmul.f32 %v608, 0.044715
    %v673 = vmul.f32 %v609, 0.044715
    %v674 = vmul.f32 %v610, 0.044715
    %v675 = vmul.f32 %v611, 0.044715
    %v676 = vmul.f32 %v612, 0.044715
    %v677 = vmul.f32 %v613, 0.044715
    %v678 = vmul.f32 %v614, 0.044715
    %v679 = vmul.f32 %v615, 0.044715
    %v680 = vmul.f32 %v616, 0.044715
    %v681 = vmul.f32 %v617, 0.044715
    %v682 = vmul.f32 %v618, 0.044715
    %v683 = vmul.f32 %v619, 0.044715
    %v684 = vmul.f32 %v620, 0.044715
    %v685 = vmul.f32 %v621, 0.044715
    %v686 = vmul.f32 %v622, 0.044715
    %v687 = vmul.f32 %v623, 0.044715
    %v688 = vmul.f32 %v624, 0.044715
    %v689 = vmul.f32 %v625, 0.044715
    %v690 = vmul.f32 %v626, 0.044715
    %v691 = vmul.f32 %v627, 0.044715
    %v692 = vmul.f32 %v628, 0.044715
    %v693 = vmul.f32 %v629, 0.044715
    %v694 = vmul.f32 %v630, 0.044715
    %v695 = vmul.f32 %v631, 0.044715
    %v696 = vmul.f32 %v632, 0.044715
    %v697 = vmul.f32 %v633, 0.044715
    %v698 = vmul.f32 %v634, 0.044715
    %v699 = vmul.f32 %v635, 0.044715
    %v700 = vmul.f32 %v636, 0.044715
    %v701 = vmul.f32 %v637, 0.044715
    %v702 = vmul.f32 %v638, 0.044715
    %v703 = vmul.f32 %v639, 0.044715
    %v704 = vmul.f32 %v640, 0.044715
    %v705 = vmul.f32 %v641, 0.044715
    %v706 = vmul.f32 %v642, 0.044715
    %v707 = vmul.f32 %v643, 0.044715
    %v708 = vmul.f32 %v644, 0.044715
    %v709 = vmul.f32 %v645, 0.044715
    %v710 = vmul.f32 %v646, 0.044715
    %v711 = vmul.f32 %v647, 0.044715
    %v712 = vmul.f32 %v648, 0.044715
    %v713 = vmul.f32 %v649, 0.044715
    %v714 = vmul.f32 %v650, 0.044715
    %v715 = vmul.f32 %v651, 0.044715
    %v716 = vmul.f32 %v652, 0.044715
    %v717 = vmul.f32 %v653, 0.044715
    %v718 = vmul.f32 %v654, 0.044715
    %v719 = vmul.f32 %v655, 0.044715
    %v720 = vmul.f32 %v656, 0.044715
    %v721 = vmul.f32 %v657, 0.044715
    %v722 = vmul.f32 %v658, 0.044715
    %v723 = vmul.f32 %v659, 0.044715
    %v724 = vmul.f32 %v660, 0.044715
    %v725 = vmul.f32 %v661, 0.044715
    %v726 = vmul.f32 %v662, 0.044715
    %v727 = vmul.f32 %v663, 0.044715
    %v728 = vmul.f32 %v664, 0.044715
    %v729 = vmul.f32 %v665, 0.044715
    %v730 = vmul.f32 %v666, 0.044715
    %v731 = vadd.f32 %v348, %v667
    %v732 = vadd.f32 %v350, %v668
    %v733 = vadd.f32 %v461, %v669
    %v734 = vadd.f32 %v463, %v670
    %v735 = vadd.f32 %v352, %v671
    %v736 = vadd.f32 %v354, %v672
    %v737 = vadd.f32 %v465, %v673
    %v738 = vadd.f32 %v467, %v674
    %v739 = vadd.f32 %v358, %v675
    %v740 = vadd.f32 %v360, %v676
    %v741 = vadd.f32 %v471, %v677
    %v742 = vadd.f32 %v473, %v678
    %v743 = vadd.f32 %v362, %v679
    %v744 = vadd.f32 %v364, %v680
    %v745 = vadd.f32 %v475, %v681
    %v746 = vadd.f32 %v477, %v682
    %v747 = vadd.f32 %v368, %v683
    %v748 = vadd.f32 %v370, %v684
    %v749 = vadd.f32 %v481, %v685
    %v750 = vadd.f32 %v483, %v686
    %v751 = vadd.f32 %v372, %v687
    %v752 = vadd.f32 %v374, %v688
    %v753 = vadd.f32 %v485, %v689
    %v754 = vadd.f32 %v487, %v690
    %v755 = vadd.f32 %v378, %v691
    %v756 = vadd.f32 %v380, %v692
    %v757 = vadd.f32 %v491, %v693
    %v758 = vadd.f32 %v493, %v694
    %v759 = vadd.f32 %v382, %v695
    %v760 = vadd.f32 %v384, %v696
    %v761 = vadd.f32 %v495, %v697
    %v762 = vadd.f32 %v497, %v698
    %v763 = vadd.f32 %v388, %v699
    %v764 = vadd.f32 %v390, %v700
    %v765 = vadd.f32 %v501, %v701
    %v766 = vadd.f32 %v503, %v702
    %v767 = vadd.f32 %v392, %v703
    %v768 = vadd.f32 %v394, %v704
    %v769 = vadd.f32 %v505, %v705
    %v770 = vadd.f32 %v507, %v706
    %v771 = vadd.f32 %v398, %v707
    %v772 = vadd.f32 %v400, %v708
    %v773 = vadd.f32 %v511, %v709
    %v774 = vadd.f32 %v513, %v710
    %v775 = vadd.f32 %v402, %v711
    %v776 = vadd.f32 %v404, %v712
    %v777 = vadd.f32 %v515, %v713
    %v778 = vadd.f32 %v517, %v714
    %v779 = vadd.f32 %v408, %v715
    %v780 = vadd.f32 %v410, %v716
    %v781 = vadd.f32 %v521, %v717
    %v782 = vadd.f32 %v523, %v718
    %v783 = vadd.f32 %v412, %v719
    %v784 = vadd.f32 %v414, %v720
    %v785 = vadd.f32 %v525, %v721
    %v786 = vadd.f32 %v527, %v722
    %v787 = vadd.f32 %v418, %v723
    %v788 = vadd.f32 %v420, %v724
    %v789 = vadd.f32 %v531, %v725
    %v790 = vadd.f32 %v533, %v726
    %v791 = vadd.f32 %v422, %v727
    %v792 = vadd.f32 %v424, %v728
    %v793 = vadd.f32 %v535, %v729
    %v794 = vadd.f32 %v537, %v730
    %v795 = vmul.f32 %v731, 0.7978846
    %v796 = vmul.f32 %v732, 0.7978846
    %v797 = vmul.f32 %v733, 0.7978846
    %v798 = vmul.f32 %v734, 0.7978846
    %v799 = vmul.f32 %v735, 0.7978846
    %v800 = vmul.f32 %v736, 0.7978846
    %v801 = vmul.f32 %v737, 0.7978846
    %v802 = vmul.f32 %v738, 0.7978846
    %v803 = vmul.f32 %v739, 0.7978846
    %v804 = vmul.f32 %v740, 0.7978846
    %v805 = vmul.f32 %v741, 0.7978846
    %v806 = vmul.f32 %v742, 0.7978846
    %v807 = vmul.f32 %v743, 0.7978846
    %v808 = vmul.f32 %v744, 0.7978846
    %v809 = vmul.f32 %v745, 0.7978846
    %v810 = vmul.f32 %v746, 0.7978846
    %v811 = vmul.f32 %v747, 0.7978846
    %v812 = vmul.f32 %v748, 0.7978846
    %v813 = vmul.f32 %v749, 0.7978846
    %v814 = vmul.f32 %v750, 0.7978846
    %v815 = vmul.f32 %v751, 0.7978846
    %v816 = vmul.f32 %v752, 0.7978846
    %v817 = vmul.f32 %v753, 0.7978846
    %v818 = vmul.f32 %v754, 0.7978846
    %v819 = vmul.f32 %v755, 0.7978846
    %v820 = vmul.f32 %v756, 0.7978846
    %v821 = vmul.f32 %v757, 0.7978846
    %v822 = vmul.f32 %v758, 0.7978846
    %v823 = vmul.f32 %v759, 0.7978846
    %v824 = vmul.f32 %v760, 0.7978846
    %v825 = vmul.f32 %v761, 0.7978846
    %v826 = vmul.f32 %v762, 0.7978846
    %v827 = vmul.f32 %v763, 0.7978846
    %v828 = vmul.f32 %v764, 0.7978846
    %v829 = vmul.f32 %v765, 0.7978846
    %v830 = vmul.f32 %v766, 0.7978846
    %v831 = vmul.f32 %v767, 0.7978846
    %v832 = vmul.f32 %v768, 0.7978846
    %v833 = vmul.f32 %v769, 0.7978846
    %v834 = vmul.f32 %v770, 0.7978846
    %v835 = vmul.f32 %v771, 0.7978846
    %v836 = vmul.f32 %v772, 0.7978846
    %v837 = vmul.f32 %v773, 0.7978846
    %v838 = vmul.f32 %v774, 0.7978846
    %v839 = vmul.f32 %v775, 0.7978846
    %v840 = vmul.f32 %v776, 0.7978846
    %v841 = vmul.f32 %v777, 0.7978846
    %v842 = vmul.f32 %v778, 0.7978846
    %v843 = vmul.f32 %v779, 0.7978846
    %v844 = vmul.f32 %v780, 0.7978846
    %v845 = vmul.f32 %v781, 0.7978846
    %v846 = vmul.f32 %v782, 0.7978846
    %v847 = vmul.f32 %v783, 0.7978846
    %v848 = vmul.f32 %v784, 0.7978846
    %v849 = vmul.f32 %v785, 0.7978846
    %v850 = vmul.f32 %v786, 0.7978846
    %v851 = vmul.f32 %v787, 0.7978846
    %v852 = vmul.f32 %v788, 0.7978846
    %v853 = vmul.f32 %v789, 0.7978846
    %v854 = vmul.f32 %v790, 0.7978846
    %v855 = vmul.f32 %v791, 0.7978846
    %v856 = vmul.f32 %v792, 0.7978846
    %v857 = vmul.f32 %v793, 0.7978846
    %v858 = vmul.f32 %v794, 0.7978846
    %v859 = vtanh.pop %v795
    %v860 = vtanh.pop %v796
    %v861 = vtanh.pop %v797
    %v862 = vtanh.pop %v798
    %v863 = vtanh.pop %v799
    %v864 = vtanh.pop %v800
    %v865 = vtanh.pop %v801
    %v866 = vtanh.pop %v802
    %v867 = vtanh.pop %v803
    %v868 = vtanh.pop %v804
    %v869 = vtanh.pop %v805
    %v870 = vtanh.pop %v806
    %v871 = vtanh.pop %v807
    %v872 = vtanh.pop %v808
    %v873 = vtanh.pop %v809
    %v874 = vtanh.pop %v810
    %v875 = vtanh.pop %v811
    %v876 = vtanh.pop %v812
    %v877 = vtanh.pop %v813
    %v878 = vtanh.pop %v814
    %v879 = vtanh.pop %v815
    %v880 = vtanh.pop %v816
    %v881 = vtanh.pop %v817
    %v882 = vtanh.pop %v818
    %v883 = vtanh.pop %v819
    %v884 = vtanh.pop %v820
    %v885 = vtanh.pop %v821
    %v886 = vtanh.pop %v822
    %v887 = vtanh.pop %v823
    %v888 = vtanh.pop %v824
    %v889 = vtanh.pop %v825
    %v890 = vtanh.pop %v826
    %v891 = vtanh.pop %v827
    %v892 = vtanh.pop %v828
    %v893 = vtanh.pop %v829
    %v894 = vtanh.pop %v830
    %v895 = vtanh.pop %v831
    %v896 = vtanh.pop %v832
    %v897 = vtanh.pop %v833
    %v898 = vtanh.pop %v834
    %v899 = vtanh.pop %v835
    %v900 = vtanh.pop %v836
    %v901 = vtanh.pop %v837
    %v902 = vtanh.pop %v838
    %v903 = vtanh.pop %v839
    %v904 = vtanh.pop %v840
    %v905 = vtanh.pop %v841
    %v906 = vtanh.pop %v842
    %v907 = vtanh.pop %v843
    %v908 = vtanh.pop %v844
    %v909 = vtanh.pop %v845
    %v910 = vtanh.pop %v846
    %v911 = vtanh.pop %v847
    %v912 = vtanh.pop %v848
    %v913 = vtanh.pop %v849
    %v914 = vtanh.pop %v850
    %v915 = vtanh.pop %v851
    %v916 = vtanh.pop %v852
    %v917 = vtanh.pop %v853
    %v918 = vtanh.pop %v854
    %v919 = vtanh.pop %v855
    %v920 = vtanh.pop %v856
    %v921 = vtanh.pop %v857
    %v922 = vtanh.pop %v858
    %v923 = vadd.f32 %v859, 1.0
    %v924 = vadd.f32 %v860, 1.0
    %v925 = vadd.f32 %v861, 1.0
    %v926 = vadd.f32 %v862, 1.0
    %v927 = vadd.f32 %v863, 1.0
    %v928 = vadd.f32 %v864, 1.0
    %v929 = vadd.f32 %v865, 1.0
    %v930 = vadd.f32 %v866, 1.0
    %v931 = vadd.f32 %v867, 1.0
    %v932 = vadd.f32 %v868, 1.0
    %v933 = vadd.f32 %v869, 1.0
    %v934 = vadd.f32 %v870, 1.0
    %v935 = vadd.f32 %v871, 1.0
    %v936 = vadd.f32 %v872, 1.0
    %v937 = vadd.f32 %v873, 1.0
    %v938 = vadd.f32 %v874, 1.0
    %v939 = vadd.f32 %v875, 1.0
    %v940 = vadd.f32 %v876, 1.0
    %v941 = vadd.f32 %v877, 1.0
    %v942 = vadd.f32 %v878, 1.0
    %v943 = vadd.f32 %v879, 1.0
    %v944 = vadd.f32 %v880, 1.0
    %v945 = vadd.f32 %v881, 1.0
    %v946 = vadd.f32 %v882, 1.0
    %v947 = vadd.f32 %v883, 1.0
    %v948 = vadd.f32 %v884, 1.0
    %v949 = vadd.f32 %v885, 1.0
    %v950 = vadd.f32 %v886, 1.0
    %v951 = vadd.f32 %v887, 1.0
    %v952 = vadd.f32 %v888, 1.0
    %v953 = vadd.f32 %v889, 1.0
    %v954 = vadd.f32 %v890, 1.0
    %v955 = vadd.f32 %v891, 1.0
    %v956 = vadd.f32 %v892, 1.0
    %v957 = vadd.f32 %v893, 1.0
    %v958 = vadd.f32 %v894, 1.0
    %v959 = vadd.f32 %v895, 1.0
    %v960 = vadd.f32 %v896, 1.0
    %v961 = vadd.f32 %v897, 1.0
    %v962 = vadd.f32 %v898, 1.0
    %v963 = vadd.f32 %v899, 1.0
    %v964 = vadd.f32 %v900, 1.0
    %v965 = vadd.f32 %v901, 1.0
    %v966 = vadd.f32 %v902, 1.0
    %v967 = vadd.f32 %v903, 1.0
    %v968 = vadd.f32 %v904, 1.0
    %v969 = vadd.f32 %v905, 1.0
    %v970 = vadd.f32 %v906, 1.0
    %v971 = vadd.f32 %v907, 1.0
    %v972 = vadd.f32 %v908, 1.0
    %v973 = vadd.f32 %v909, 1.0
    %v974 = vadd.f32 %v910, 1.0
    %v975 = vadd.f32 %v911, 1.0
    %v976 = vadd.f32 %v912, 1.0
    %v977 = vadd.f32 %v913, 1.0
    %v978 = vadd.f32 %v914, 1.0
    %v979 = vadd.f32 %v915, 1.0
    %v980 = vadd.f32 %v916, 1.0
    %v981 = vadd.f32 %v917, 1.0
    %v982 = vadd.f32 %v918, 1.0
    %v983 = vadd.f32 %v919, 1.0
    %v984 = vadd.f32 %v920, 1.0
    %v985 = vadd.f32 %v921, 1.0
    %v986 = vadd.f32 %v922, 1.0
    %v987 = vmul.f32 %v923, 0.5
    %v988 = vmul.f32 %v924, 0.5
    %v989 = vmul.f32 %v925, 0.5
    %v990 = vmul.f32 %v926, 0.5
    %v991 = vmul.f32 %v927, 0.5
    %v992 = vmul.f32 %v928, 0.5
    %v993 = vmul.f32 %v929, 0.5
    %v994 = vmul.f32 %v930, 0.5
    %v995 = vmul.f32 %v931, 0.5
    %v996 = vmul.f32 %v932, 0.5
    %v997 = vmul.f32 %v933, 0.5
    %v998 = vmul.f32 %v934, 0.5
    %v999 = vmul.f32 %v935, 0.5
    %v1000 = vmul.f32 %v936, 0.5
    %v1001 = vmul.f32 %v937, 0.5
    %v1002 = vmul.f32 %v938, 0.5
    %v1003 = vmul.f32 %v939, 0.5
    %v1004 = vmul.f32 %v940, 0.5
    %v1005 = vmul.f32 %v941, 0.5
    %v1006 = vmul.f32 %v942, 0.5
    %v1007 = vmul.f32 %v943, 0.5
    %v1008 = vmul.f32 %v944, 0.5
    %v1009 = vmul.f32 %v945, 0.5
    %v1010 = vmul.f32 %v946, 0.5
    %v1011 = vmul.f32 %v947, 0.5
    %v1012 = vmul.f32 %v948, 0.5
    %v1013 = vmul.f32 %v949, 0.5
    %v1014 = vmul.f32 %v950, 0.5
    %v1015 = vmul.f32 %v951, 0.5
    %v1016 = vmul.f32 %v952, 0.5
    %v1017 = vmul.f32 %v953, 0.5
    %v1018 = vmul.f32 %v954, 0.5
    %v1019 = vmul.f32 %v955, 0.5
    %v1020 = vmul.f32 %v956, 0.5
    %v1021 = vmul.f32 %v957, 0.5
    %v1022 = vmul.f32 %v958, 0.5
    %v1023 = vmul.f32 %v959, 0.5
    %v1024 = vmul.f32 %v960, 0.5
    %v1025 = vmul.f32 %v961, 0.5
    %v1026 = vmul.f32 %v962, 0.5
    %v1027 = vmul.f32 %v963, 0.5
    %v1028 = vmul.f32 %v964, 0.5
    %v1029 = vmul.f32 %v965, 0.5
    %v1030 = vmul.f32 %v966, 0.5
    %v1031 = vmul.f32 %v967, 0.5
    %v1032 = vmul.f32 %v968, 0.5
    %v1033 = vmul.f32 %v969, 0.5
    %v1034 = vmul.f32 %v970, 0.5
    %v1035 = vmul.f32 %v971, 0.5
    %v1036 = vmul.f32 %v972, 0.5
    %v1037 = vmul.f32 %v973, 0.5
    %v1038 = vmul.f32 %v974, 0.5
    %v1039 = vmul.f32 %v975, 0.5
    %v1040 = vmul.f32 %v976, 0.5
    %v1041 = vmul.f32 %v977, 0.5
    %v1042 = vmul.f32 %v978, 0.5
    %v1043 = vmul.f32 %v979, 0.5
    %v1044 = vmul.f32 %v980, 0.5
    %v1045 = vmul.f32 %v981, 0.5
    %v1046 = vmul.f32 %v982, 0.5
    %v1047 = vmul.f32 %v983, 0.5
    %v1048 = vmul.f32 %v984, 0.5
    %v1049 = vmul.f32 %v985, 0.5
    %v1050 = vmul.f32 %v986, 0.5
    %v1051 = vmul.f32 %v348, %v987
    %v1052 = vmul.f32 %v350, %v988
    %v1053 = vmul.f32 %v461, %v989
    %v1054 = vmul.f32 %v463, %v990
    %v1055 = vmul.f32 %v352, %v991
    %v1056 = vmul.f32 %v354, %v992
    %v1057 = vmul.f32 %v465, %v993
    %v1058 = vmul.f32 %v467, %v994
    %v1059 = vmul.f32 %v358, %v995
    %v1060 = vmul.f32 %v360, %v996
    %v1061 = vmul.f32 %v471, %v997
    %v1062 = vmul.f32 %v473, %v998
    %v1063 = vmul.f32 %v362, %v999
    %v1064 = vmul.f32 %v364, %v1000
    %v1065 = vmul.f32 %v475, %v1001
    %v1066 = vmul.f32 %v477, %v1002
    %v1067 = vmul.f32 %v368, %v1003
    %v1068 = vmul.f32 %v370, %v1004
    %v1069 = vmul.f32 %v481, %v1005
    %v1070 = vmul.f32 %v483, %v1006
    %v1071 = vmul.f32 %v372, %v1007
    %v1072 = vmul.f32 %v374, %v1008
    %v1073 = vmul.f32 %v485, %v1009
    %v1074 = vmul.f32 %v487, %v1010
    %v1075 = vmul.f32 %v378, %v1011
    %v1076 = vmul.f32 %v380, %v1012
    %v1077 = vmul.f32 %v491, %v1013
    %v1078 = vmul.f32 %v493, %v1014
    %v1079 = vmul.f32 %v382, %v1015
    %v1080 = vmul.f32 %v384, %v1016
    %v1081 = vmul.f32 %v495, %v1017
    %v1082 = vmul.f32 %v497, %v1018
    %v1083 = vmul.f32 %v388, %v1019
    %v1084 = vmul.f32 %v390, %v1020
    %v1085 = vmul.f32 %v501, %v1021
    %v1086 = vmul.f32 %v503, %v1022
    %v1087 = vmul.f32 %v392, %v1023
    %v1088 = vmul.f32 %v394, %v1024
    %v1089 = vmul.f32 %v505, %v1025
    %v1090 = vmul.f32 %v507, %v1026
    %v1091 = vmul.f32 %v398, %v1027
    %v1092 = vmul.f32 %v400, %v1028
    %v1093 = vmul.f32 %v511, %v1029
    %v1094 = vmul.f32 %v513, %v1030
    %v1095 = vmul.f32 %v402, %v1031
    %v1096 = vmul.f32 %v404, %v1032
    %v1097 = vmul.f32 %v515, %v1033
    %v1098 = vmul.f32 %v517, %v1034
    %v1099 = vmul.f32 %v408, %v1035
    %v1100 = vmul.f32 %v410, %v1036
    %v1101 = vmul.f32 %v521, %v1037
    %v1102 = vmul.f32 %v523, %v1038
    %v1103 = vmul.f32 %v412, %v1039
    %v1104 = vmul.f32 %v414, %v1040
    %v1105 = vmul.f32 %v525, %v1041
    %v1106 = vmul.f32 %v527, %v1042
    %v1107 = vmul.f32 %v418, %v1043
    %v1108 = vmul.f32 %v420, %v1044
    %v1109 = vmul.f32 %v531, %v1045
    %v1110 = vmul.f32 %v533, %v1046
    %v1111 = vmul.f32 %v422, %v1047
    %v1112 = vmul.f32 %v424, %v1048
    %v1113 = vmul.f32 %v535, %v1049
    %v1114 = vmul.f32 %v537, %v1050
    %v1115 = vpack.c.bf16 %v1055, %v1051
    %v1116 = vpack.c.bf16 %v1056, %v1052
    %v1117 = vpack.c.bf16 %v1057, %v1053
    %v1118 = vpack.c.bf16 %v1058, %v1054
    %v1119 = vpack.c.bf16 %v1063, %v1059
    %v1120 = vpack.c.bf16 %v1064, %v1060
    %v1121 = vpack.c.bf16 %v1065, %v1061
    %v1122 = vpack.c.bf16 %v1066, %v1062
    %v1123 = vpack.c.bf16 %v1071, %v1067
    %v1124 = vpack.c.bf16 %v1072, %v1068
    %v1125 = vpack.c.bf16 %v1073, %v1069
    %v1126 = vpack.c.bf16 %v1074, %v1070
    %v1127 = vpack.c.bf16 %v1079, %v1075
    %v1128 = vpack.c.bf16 %v1080, %v1076
    %v1129 = vpack.c.bf16 %v1081, %v1077
    %v1130 = vpack.c.bf16 %v1082, %v1078
    %v1131 = vpack.c.bf16 %v1087, %v1083
    %v1132 = vpack.c.bf16 %v1088, %v1084
    %v1133 = vpack.c.bf16 %v1089, %v1085
    %v1134 = vpack.c.bf16 %v1090, %v1086
    %v1135 = vpack.c.bf16 %v1095, %v1091
    %v1136 = vpack.c.bf16 %v1096, %v1092
    %v1137 = vpack.c.bf16 %v1097, %v1093
    %v1138 = vpack.c.bf16 %v1098, %v1094
    %v1139 = vpack.c.bf16 %v1103, %v1099
    %v1140 = vpack.c.bf16 %v1104, %v1100
    %v1141 = vpack.c.bf16 %v1105, %v1101
    %v1142 = vpack.c.bf16 %v1106, %v1102
    %v1143 = vpack.c.bf16 %v1111, %v1107
    %v1144 = vpack.c.bf16 %v1112, %v1108
    %v1145 = vpack.c.bf16 %v1113, %v1109
    %v1146 = vpack.c.bf16 %v1114, %v1110
    %v1147 = vld [vmem:[#allocation8] sm:$0xf]
    %v1148 = vld [vmem:[#allocation8 + $0x4] sm:$0xf]
    %v1149 = vld [vmem:[#allocation8 + $0x8] sm:$0xf]
    %v1150 = vld [vmem:[#allocation8 + $0xc] sm:$0xf]
    %v1151 = vld [vmem:[#allocation8 + $0x10] sm:$0xf]
    %v1152 = vld [vmem:[#allocation8 + $0x14] sm:$0xf]
    %v1153 = vld [vmem:[#allocation8 + $0x18] sm:$0xf]
    %v1154 = vld [vmem:[#allocation8 + $0x1c] sm:$0xf]
    %v1155 = vld [vmem:[#allocation8 + $0x20] sm:$0xf]
    %v1156 = vld [vmem:[#allocation8 + $0x24] sm:$0xf]
    %v1157 = vld [vmem:[#allocation8 + $0x28] sm:$0xf]
    %v1158 = vld [vmem:[#allocation8 + $0x2c] sm:$0xf]
    %v1159 = vld [vmem:[#allocation8 + $0x30] sm:$0xf]
    %v1160 = vld [vmem:[#allocation8 + $0x34] sm:$0xf]
    %v1161 = vld [vmem:[#allocation8 + $0x38] sm:$0xf]
    %v1162 = vld [vmem:[#allocation8 + $0x3c] sm:$0xf]
    %v1163 = vld [vmem:[#allocation8 + $0x40] sm:$0xf]
    %v1164 = vld [vmem:[#allocation8 + $0x44] sm:$0xf]
    %v1165 = vld [vmem:[#allocation8 + $0x48] sm:$0xf]
    %v1166 = vld [vmem:[#allocation8 + $0x4c] sm:$0xf]
    %v1167 = vld [vmem:[#allocation8 + $0x50] sm:$0xf]
    %v1168 = vld [vmem:[#allocation8 + $0x54] sm:$0xf]
    %v1169 = vld [vmem:[#allocation8 + $0x58] sm:$0xf]
    %v1170 = vld [vmem:[#allocation8 + $0x5c] sm:$0xf]
    %v1171 = vld [vmem:[#allocation8 + $0x60] sm:$0xf]
    %v1172 = vld [vmem:[#allocation8 + $0x64] sm:$0xf]
    %v1173 = vld [vmem:[#allocation8 + $0x68] sm:$0xf]
    %v1174 = vld [vmem:[#allocation8 + $0x6c] sm:$0xf]
    %v1175 = vld [vmem:[#allocation8 + $0x70] sm:$0xf]
    %v1176 = vld [vmem:[#allocation8 + $0x74] sm:$0xf]
    %v1177 = vld [vmem:[#allocation8 + $0x78] sm:$0xf]
    %v1178 = vld [vmem:[#allocation8 + $0x7c] sm:$0xf]
    %v1179 = vld [vmem:[#allocation8 + $0x80] sm:$0xf]
    %v1180 = vld [vmem:[#allocation8 + $0x84] sm:$0xf]
    %v1181 = vld [vmem:[#allocation8 + $0x88] sm:$0xf]
    %v1182 = vld [vmem:[#allocation8 + $0x8c] sm:$0xf]
    %v1183 = vld [vmem:[#allocation8 + $0x90] sm:$0xf]
    %v1184 = vld [vmem:[#allocation8 + $0x94] sm:$0xf]
    %v1185 = vld [vmem:[#allocation8 + $0x98] sm:$0xf]
    %v1186 = vld [vmem:[#allocation8 + $0x9c] sm:$0xf]
    %v1187 = vld [vmem:[#allocation8 + $0xa0] sm:$0xf]
    %v1188 = vld [vmem:[#allocation8 + $0xa4] sm:$0xf]
    %v1189 = vld [vmem:[#allocation8 + $0xa8] sm:$0xf]
    %v1190 = vld [vmem:[#allocation8 + $0xac] sm:$0xf]
    %v1191 = vld [vmem:[#allocation8 + $0xb0] sm:$0xf]
    %v1192 = vld [vmem:[#allocation8 + $0xb4] sm:$0xf]
    %v1193 = vld [vmem:[#allocation8 + $0xb8] sm:$0xf]
    %v1194 = vld [vmem:[#allocation8 + $0xbc] sm:$0xf]
    %v1195 = vld [vmem:[#allocation8 + $0xc0] sm:$0xf]
    %v1196 = vld [vmem:[#allocation8 + $0xc4] sm:$0xf]
    %v1197 = vld [vmem:[#allocation8 + $0xc8] sm:$0xf]
    %v1198 = vld [vmem:[#allocation8 + $0xcc] sm:$0xf]
    %v1199 = vld [vmem:[#allocation8 + $0xd0] sm:$0xf]
    %v1200 = vld [vmem:[#allocation8 + $0xd4] sm:$0xf]
    %v1201 = vld [vmem:[#allocation8 + $0xd8] sm:$0xf]
    %v1202 = vld [vmem:[#allocation8 + $0xdc] sm:$0xf]
    %v1203 = vld [vmem:[#allocation8 + $0xe0] sm:$0xf]
    %v1204 = vld [vmem:[#allocation8 + $0xe4] sm:$0xf]
    %v1205 = vld [vmem:[#allocation8 + $0xe8] sm:$0xf]
    %v1206 = vld [vmem:[#allocation8 + $0xec] sm:$0xf]
    %v1207 = vld [vmem:[#allocation8 + $0xf0] sm:$0xf]
    %v1208 = vld [vmem:[#allocation8 + $0xf4] sm:$0xf]
    %v1209 = vld [vmem:[#allocation8 + $0xf8] sm:$0xf]
    %v1210 = vld [vmem:[#allocation8 + $0xfc] sm:$0xf]
    %v1211 = vld [vmem:[%s4] sm:$0x1]
    %v1213 = vlaneseq
    %v1214 = vshrl.u32 %v1213, 7
    %v1215 = vsub.s32 0, %v1214
    %v1216 = vrot.slane %v1211, %v1215
    %v1282 = vunpack.c.l.b16 %v1147
    %v1283 = vunpack.c.l.b16 %v1148
    %v1284 = vunpack.c.l.b16 %v1149
    %v1285 = vunpack.c.l.b16 %v1150
    %v1286 = vunpack.c.l.b16 %v1151
    %v1287 = vunpack.c.l.b16 %v1152
    %v1288 = vunpack.c.l.b16 %v1153
    %v1289 = vunpack.c.l.b16 %v1154
    %v1290 = vunpack.c.l.b16 %v1155
    %v1291 = vunpack.c.l.b16 %v1156
    %v1292 = vunpack.c.l.b16 %v1157
    %v1293 = vunpack.c.l.b16 %v1158
    %v1294 = vunpack.c.l.b16 %v1159
    %v1295 = vunpack.c.l.b16 %v1160
    %v1296 = vunpack.c.l.b16 %v1161
    %v1297 = vunpack.c.l.b16 %v1162
    %v1298 = vunpack.c.l.b16 %v1163
    %v1299 = vunpack.c.l.b16 %v1164
    %v1300 = vunpack.c.l.b16 %v1165
    %v1301 = vunpack.c.l.b16 %v1166
    %v1302 = vunpack.c.l.b16 %v1167
    %v1303 = vunpack.c.l.b16 %v1168
    %v1304 = vunpack.c.l.b16 %v1169
    %v1305 = vunpack.c.l.b16 %v1170
    %v1306 = vunpack.c.l.b16 %v1171
    %v1307 = vunpack.c.l.b16 %v1172
    %v1308 = vunpack.c.l.b16 %v1173
    %v1309 = vunpack.c.l.b16 %v1174
    %v1310 = vunpack.c.l.b16 %v1175
    %v1311 = vunpack.c.l.b16 %v1176
    %v1312 = vunpack.c.l.b16 %v1177
    %v1313 = vunpack.c.l.b16 %v1178
    %v1314 = vunpack.c.l.b16 %v1179
    %v1315 = vunpack.c.l.b16 %v1180
    %v1316 = vunpack.c.l.b16 %v1181
    %v1317 = vunpack.c.l.b16 %v1182
    %v1318 = vunpack.c.l.b16 %v1183
    %v1319 = vunpack.c.l.b16 %v1184
    %v1320 = vunpack.c.l.b16 %v1185
    %v1321 = vunpack.c.l.b16 %v1186
    %v1322 = vunpack.c.l.b16 %v1187
    %v1323 = vunpack.c.l.b16 %v1188
    %v1324 = vunpack.c.l.b16 %v1189
    %v1325 = vunpack.c.l.b16 %v1190
    %v1326 = vunpack.c.l.b16 %v1191
    %v1327 = vunpack.c.l.b16 %v1192
    %v1328 = vunpack.c.l.b16 %v1193
    %v1329 = vunpack.c.l.b16 %v1194
    %v1330 = vunpack.c.l.b16 %v1195
    %v1331 = vunpack.c.l.b16 %v1196
    %v1332 = vunpack.c.l.b16 %v1197
    %v1333 = vunpack.c.l.b16 %v1198
    %v1334 = vunpack.c.l.b16 %v1199
    %v1335 = vunpack.c.l.b16 %v1200
    %v1336 = vunpack.c.l.b16 %v1201
    %v1337 = vunpack.c.l.b16 %v1202
    %v1338 = vunpack.c.l.b16 %v1203
    %v1339 = vunpack.c.l.b16 %v1204
    %v1340 = vunpack.c.l.b16 %v1205
    %v1341 = vunpack.c.l.b16 %v1206
    %v1342 = vunpack.c.l.b16 %v1207
    %v1343 = vunpack.c.l.b16 %v1208
    %v1344 = vunpack.c.l.b16 %v1209
    %v1345 = vunpack.c.l.b16 %v1210
    %v1346 = vpack.c.b16 %v1283, %v1282
    %v1347 = vpack.c.b16 %v1285, %v1284
    %v1348 = vpack.c.b16 %v1287, %v1286
    %v1349 = vpack.c.b16 %v1289, %v1288
    %v1350 = vpack.c.b16 %v1291, %v1290
    %v1351 = vpack.c.b16 %v1293, %v1292
    %v1352 = vpack.c.b16 %v1295, %v1294
    %v1353 = vpack.c.b16 %v1297, %v1296
    %v1354 = vpack.c.b16 %v1299, %v1298
    %v1355 = vpack.c.b16 %v1301, %v1300
    %v1356 = vpack.c.b16 %v1303, %v1302
    %v1357 = vpack.c.b16 %v1305, %v1304
    %v1358 = vpack.c.b16 %v1307, %v1306
    %v1359 = vpack.c.b16 %v1309, %v1308
    %v1360 = vpack.c.b16 %v1311, %v1310
    %v1361 = vpack.c.b16 %v1313, %v1312
    %v1362 = vpack.c.b16 %v1315, %v1314
    %v1363 = vpack.c.b16 %v1317, %v1316
    %v1364 = vpack.c.b16 %v1319, %v1318
    %v1365 = vpack.c.b16 %v1321, %v1320
    %v1366 = vpack.c.b16 %v1323, %v1322
    %v1367 = vpack.c.b16 %v1325, %v1324
    %v1368 = vpack.c.b16 %v1327, %v1326
    %v1369 = vpack.c.b16 %v1329, %v1328
    %v1370 = vpack.c.b16 %v1331, %v1330
    %v1371 = vpack.c.b16 %v1333, %v1332
    %v1372 = vpack.c.b16 %v1335, %v1334
    %v1373 = vpack.c.b16 %v1337, %v1336
    %v1374 = vpack.c.b16 %v1339, %v1338
    %v1375 = vpack.c.b16 %v1341, %v1340
    %v1376 = vpack.c.b16 %v1343, %v1342
    %v1377 = vpack.c.b16 %v1345, %v1344
    %1410 = vmatprep.subr.bf16.mxu0 0
    %1411 = vmatpush1.bf16.msra.mxu0 %v1353
    %1412 = vmatprep.subr.bf16.mxu0 0
    %1413 = vmatpush1.bf16.msra.mxu0 %v1352
    %1414 = vmatprep.subr.bf16.mxu0 0
    %1415 = vmatpush1.bf16.msra.mxu0 %v1351
    %1416 = vmatprep.subr.bf16.mxu0 0
    %1417 = vmatpush1.bf16.msra.mxu0 %v1350
    %1418 = vmatprep.subr.bf16.mxu0 0
    %1419 = vmatpush1.bf16.msra.mxu0 %v1349
    %1420 = vmatprep.subr.bf16.mxu0 0
    %1421 = vmatpush1.bf16.msra.mxu0 %v1348
    %1422 = vmatprep.subr.bf16.mxu0 0
    %1423 = vmatpush1.bf16.msra.mxu0 %v1347
    %1424 = vmatprep.subr.bf16.mxu0 0
    %1425 = vmatpush1.bf16.msra.mxu0 %v1346
    %1426 = vmatprep.subr.bf16.mxu0 0
    %1427 = vmatpush2.bf16.msra.mxu0 %v1361
    %1428 = vmatprep.subr.bf16.mxu0 0
    %1429 = vmatpush2.bf16.msra.mxu0 %v1360
    %1430 = vmatprep.subr.bf16.mxu0 0
    %1431 = vmatpush2.bf16.msra.mxu0 %v1359
    %1432 = vmatprep.subr.bf16.mxu0 0
    %1433 = vmatpush2.bf16.msra.mxu0 %v1358
    %1434 = vmatprep.subr.bf16.mxu0 0
    %1435 = vmatpush2.bf16.msra.mxu0 %v1357
    %1436 = vmatprep.subr.bf16.mxu0 0
    %1437 = vmatpush2.bf16.msra.mxu0 %v1356
    %1438 = vmatprep.subr.bf16.mxu0 0
    %1439 = vmatpush2.bf16.msra.mxu0 %v1355
    %1440 = vmatprep.subr.bf16.mxu0 0
    %1441 = vmatpush2.bf16.msra.mxu0 %v1354
    %1442 = vmatprep.mubr.bf16.mxu0 %v1116
    %1443 = vmatmul.mubr.bf16.gmra.mxu0 %v1115
    %v1444 = vpop.f32.mrf.mxu0
    %v1445 = vadd.f32 %v1216, %v1444
    %v1446 = vpop.f32.mrf.mxu0
    %v1447 = vpop.f32.mrf.mxu0
    %v1448 = vadd.f32 %v1216, %v1447
    %v1449 = vpop.f32.mrf.mxu0
    %1450 = vmatprep.mubr.bf16.mxu0 %v1120
    %1451 = vmatmul.mubr.bf16.gmra.mxu0 %v1119
    %v1452 = vpop.f32.mrf.mxu0
    %v1453 = vadd.f32 %v1216, %v1452
    %v1454 = vpop.f32.mrf.mxu0
    %v1455 = vpop.f32.mrf.mxu0
    %v1456 = vadd.f32 %v1216, %v1455
    %v1457 = vpop.f32.mrf.mxu0
    %1458 = vmatprep.mubr.bf16.mxu0 %v1124
    %1459 = vmatmul.mubr.bf16.gmra.mxu0 %v1123
    %v1460 = vpop.f32.mrf.mxu0
    %v1461 = vadd.f32 %v1216, %v1460
    %v1462 = vpop.f32.mrf.mxu0
    %v1463 = vpop.f32.mrf.mxu0
    %v1464 = vadd.f32 %v1216, %v1463
    %v1465 = vpop.f32.mrf.mxu0
    %1466 = vmatprep.mubr.bf16.mxu0 %v1128
    %1467 = vmatmul.mubr.bf16.gmra.mxu0 %v1127
    %v1468 = vpop.f32.mrf.mxu0
    %v1469 = vadd.f32 %v1216, %v1468
    %v1470 = vpop.f32.mrf.mxu0
    %v1471 = vpop.f32.mrf.mxu0
    %v1472 = vadd.f32 %v1216, %v1471
    %v1473 = vpop.f32.mrf.mxu0
    %1474 = vmatprep.mubr.bf16.mxu0 %v1132
    %1475 = vmatmul.mubr.bf16.gmra.mxu0 %v1131
    %v1476 = vpop.f32.mrf.mxu0
    %v1477 = vadd.f32 %v1216, %v1476
    %v1478 = vpop.f32.mrf.mxu0
    %v1479 = vpop.f32.mrf.mxu0
    %v1480 = vadd.f32 %v1216, %v1479
    %v1481 = vpop.f32.mrf.mxu0
    %1482 = vmatprep.mubr.bf16.mxu0 %v1136
    %1483 = vmatmul.mubr.bf16.gmra.mxu0 %v1135
    %v1484 = vpop.f32.mrf.mxu0
    %v1485 = vadd.f32 %v1216, %v1484
    %v1486 = vpop.f32.mrf.mxu0
    %v1487 = vpop.f32.mrf.mxu0
    %v1488 = vadd.f32 %v1216, %v1487
    %v1489 = vpop.f32.mrf.mxu0
    %1490 = vmatprep.mubr.bf16.mxu0 %v1140
    %1491 = vmatmul.mubr.bf16.gmra.mxu0 %v1139
    %v1492 = vpop.f32.mrf.mxu0
    %v1493 = vadd.f32 %v1216, %v1492
    %v1494 = vpop.f32.mrf.mxu0
    %v1495 = vpop.f32.mrf.mxu0
    %v1496 = vadd.f32 %v1216, %v1495
    %v1497 = vpop.f32.mrf.mxu0
    %1498 = vmatprep.mubr.bf16.mxu0 %v1144
    %1499 = vmatmul.mubr.bf16.gmra.mxu0 %v1143
    %v1500 = vpop.f32.mrf.mxu0
    %v1501 = vadd.f32 %v1216, %v1500
    %v1502 = vpop.f32.mrf.mxu0
    %v1503 = vpop.f32.mrf.mxu0
    %v1504 = vadd.f32 %v1216, %v1503
    %v1505 = vpop.f32.mrf.mxu0
    %1506 = vdwg.mxu0
    %1507 = vmatprep.subr.bf16.mxu0 0
    %1508 = vmatpush1.bf16.msra.mxu0 %v1369
    %1509 = vmatprep.subr.bf16.mxu0 0
    %1510 = vmatpush1.bf16.msra.mxu0 %v1368
    %1511 = vmatprep.subr.bf16.mxu0 0
    %1512 = vmatpush1.bf16.msra.mxu0 %v1367
    %1513 = vmatprep.subr.bf16.mxu0 0
    %1514 = vmatpush1.bf16.msra.mxu0 %v1366
    %1515 = vmatprep.subr.bf16.mxu0 0
    %1516 = vmatpush1.bf16.msra.mxu0 %v1365
    %1517 = vmatprep.subr.bf16.mxu0 0
    %1518 = vmatpush1.bf16.msra.mxu0 %v1364
    %1519 = vmatprep.subr.bf16.mxu0 0
    %1520 = vmatpush1.bf16.msra.mxu0 %v1363
    %1521 = vmatprep.subr.bf16.mxu0 0
    %1522 = vmatpush1.bf16.msra.mxu0 %v1362
    %1523 = vmatprep.subr.bf16.mxu0 0
    %1524 = vmatpush2.bf16.msra.mxu0 %v1377
    %1525 = vmatprep.subr.bf16.mxu0 0
    %1526 = vmatpush2.bf16.msra.mxu0 %v1376
    %1527 = vmatprep.subr.bf16.mxu0 0
    %1528 = vmatpush2.bf16.msra.mxu0 %v1375
    %1529 = vmatprep.subr.bf16.mxu0 0
    %1530 = vmatpush2.bf16.msra.mxu0 %v1374
    %1531 = vmatprep.subr.bf16.mxu0 0
    %1532 = vmatpush2.bf16.msra.mxu0 %v1373
    %1533 = vmatprep.subr.bf16.mxu0 0
    %1534 = vmatpush2.bf16.msra.mxu0 %v1372
    %1535 = vmatprep.subr.bf16.mxu0 0
    %1536 = vmatpush2.bf16.msra.mxu0 %v1371
    %1537 = vmatprep.subr.bf16.mxu0 0
    %1538 = vmatpush2.bf16.msra.mxu0 %v1370
    %1539 = vmatprep.mubr.bf16.mxu0 %v1118
    %1540 = vmatmul.mubr.bf16.gmra.mxu0 %v1117
    %v1541 = vpop.f32.mrf.mxu0
    %v1542 = vadd.f32 %v1445, %v1541
    %v1543 = vpop.f32.mrf.mxu0
    %v1544 = vpop.f32.mrf.mxu0
    %v1545 = vadd.f32 %v1448, %v1544
    %v1546 = vpop.f32.mrf.mxu0
    %1547 = vmatprep.mubr.bf16.mxu0 %v1122
    %1548 = vmatmul.mubr.bf16.gmra.mxu0 %v1121
    %v1549 = vpop.f32.mrf.mxu0
    %v1550 = vadd.f32 %v1453, %v1549
    %v1551 = vpop.f32.mrf.mxu0
    %v1552 = vpop.f32.mrf.mxu0
    %v1553 = vadd.f32 %v1456, %v1552
    %v1554 = vpop.f32.mrf.mxu0
    %1555 = vmatprep.mubr.bf16.mxu0 %v1126
    %1556 = vmatmul.mubr.bf16.gmra.mxu0 %v1125
    %v1557 = vpop.f32.mrf.mxu0
    %v1558 = vadd.f32 %v1461, %v1557
    %v1559 = vpop.f32.mrf.mxu0
    %v1560 = vpop.f32.mrf.mxu0
    %v1561 = vadd.f32 %v1464, %v1560
    %v1562 = vpop.f32.mrf.mxu0
    %1563 = vmatprep.mubr.bf16.mxu0 %v1130
    %1564 = vmatmul.mubr.bf16.gmra.mxu0 %v1129
    %v1565 = vpop.f32.mrf.mxu0
    %v1566 = vadd.f32 %v1469, %v1565
    %v1567 = vpop.f32.mrf.mxu0
    %v1568 = vpop.f32.mrf.mxu0
    %v1569 = vadd.f32 %v1472, %v1568
    %v1570 = vpop.f32.mrf.mxu0
    %1571 = vmatprep.mubr.bf16.mxu0 %v1134
    %1572 = vmatmul.mubr.bf16.gmra.mxu0 %v1133
    %v1573 = vpop.f32.mrf.mxu0
    %v1574 = vadd.f32 %v1477, %v1573
    %v1575 = vpop.f32.mrf.mxu0
    %v1576 = vpop.f32.mrf.mxu0
    %v1577 = vadd.f32 %v1480, %v1576
    %v1578 = vpop.f32.mrf.mxu0
    %1579 = vmatprep.mubr.bf16.mxu0 %v1138
    %1580 = vmatmul.mubr.bf16.gmra.mxu0 %v1137
    %v1581 = vpop.f32.mrf.mxu0
    %v1582 = vadd.f32 %v1485, %v1581
    %v1583 = vpop.f32.mrf.mxu0
    %v1584 = vpop.f32.mrf.mxu0
    %v1585 = vadd.f32 %v1488, %v1584
    %v1586 = vpop.f32.mrf.mxu0
    %1587 = vmatprep.mubr.bf16.mxu0 %v1142
    %1588 = vmatmul.mubr.bf16.gmra.mxu0 %v1141
    %v1589 = vpop.f32.mrf.mxu0
    %v1590 = vadd.f32 %v1493, %v1589
    %v1591 = vpop.f32.mrf.mxu0
    %v1592 = vpop.f32.mrf.mxu0
    %v1593 = vadd.f32 %v1496, %v1592
    %v1594 = vpop.f32.mrf.mxu0
    %1595 = vmatprep.mubr.bf16.mxu0 %v1146
    %1596 = vmatmul.mubr.bf16.gmra.mxu0 %v1145
    %v1597 = vpop.f32.mrf.mxu0
    %v1598 = vadd.f32 %v1501, %v1597
    %v1599 = vpop.f32.mrf.mxu0
    %v1600 = vpop.f32.mrf.mxu0
    %v1601 = vadd.f32 %v1504, %v1600
    %v1602 = vpop.f32.mrf.mxu0
    %1603 = vdwg.mxu0
    %v1604 = vadd.f32 %v1542, %v75
    %v1605 = vadd.f32 %v1545, %v76
    %v1606 = vadd.f32 %v1550, %v77
    %v1607 = vadd.f32 %v1553, %v78
    %v1608 = vadd.f32 %v1558, %v79
    %v1609 = vadd.f32 %v1561, %v80
    %v1610 = vadd.f32 %v1566, %v81
    %v1611 = vadd.f32 %v1569, %v82
    %v1612 = vadd.f32 %v1574, %v83
    %v1613 = vadd.f32 %v1577, %v84
    %v1614 = vadd.f32 %v1582, %v85
    %v1615 = vadd.f32 %v1585, %v86
    %v1616 = vadd.f32 %v1590, %v87
    %v1617 = vadd.f32 %v1593, %v88
    %v1618 = vadd.f32 %v1598, %v89
    %v1619 = vadd.f32 %v1601, %v90
    %1620 = vst [vmem:[#allocation10] sm:$0xff] %v1604
    %1621 = vst [vmem:[#allocation10 + $0x8] sm:$0xff] %v1605
    %1622 = vst [vmem:[#allocation10 + $0x10] sm:$0xff] %v1606
    %1623 = vst [vmem:[#allocation10 + $0x18] sm:$0xff] %v1607
    %1624 = vst [vmem:[#allocation10 + $0x20] sm:$0xff] %v1608
    %1625 = vst [vmem:[#allocation10 + $0x28] sm:$0xff] %v1609
    %1626 = vst [vmem:[#allocation10 + $0x30] sm:$0xff] %v1610
    %1627 = vst [vmem:[#allocation10 + $0x38] sm:$0xff] %v1611
    %1628 = vst [vmem:[#allocation10 + $0x40] sm:$0xff] %v1612
    %1629 = vst [vmem:[#allocation10 + $0x48] sm:$0xff] %v1613
    %1630 = vst [vmem:[#allocation10 + $0x50] sm:$0xff] %v1614
    %1631 = vst [vmem:[#allocation10 + $0x58] sm:$0xff] %v1615
    %1632 = vst [vmem:[#allocation10 + $0x60] sm:$0xff] %v1616
    %1633 = vst [vmem:[#allocation10 + $0x68] sm:$0xff] %v1617
    %1634 = vst [vmem:[#allocation10 + $0x70] sm:$0xff] %v1618
    %1635 = vst [vmem:[#allocation10 + $0x78] sm:$0xff] %v1619
    // Predicated region
    $region38: #{tpu_custom_call.1} parent=1 // pred_check
      _
    $region39: #{tpu_custom_call.1} parent=1 // pred_check_branch
      %1637 = sbr.rel (0) target = $region41
    $region40: #{tpu_custom_call.1} parent=1 // pred_region
      %s1639 = ssub.s32 2048, 2048
      %1640 = vsyncadd [#allocation4], %s1639
      %s1641 = sshll.u32 [#allocation10], 4
      %s1642 = int_to_ptr.vmem [resolvable:$true] %s1641
      %1647 = dma.vmem_to_hbm [thread:$0]  %s1642, 2048, %s5, [#allocation4], 128, 128, 8
    $region41: #{tpu_custom_call.1} parent=1 // pred_fallthru
      _
    // Predicated region
    $region42: #{tpu_custom_call.1} parent=1 // pred_check
      _
    $region43: #{tpu_custom_call.1} parent=1 // pred_check_branch
      %1649 = sbr.rel (0) target = $region45
    $region44: #{tpu_custom_call.1} parent=1 // pred_region
      %1650 = dma.done [#allocation4], 2048
    $region45: #{tpu_custom_call.1} parent=1 // pred_fallthru
      _
    %1651 = vsyncpa [#allocation3], 1
    %1652 = vsyncpa [#allocation6], 1
    %1653 = vsyncpa [#allocation9], 1
    %1654 = vsyncpa [#allocation4], 1

</llo_original>
